<compile_context>
chip_gen: v5e
topology: v5e:2x2
jax: 0.10.0
libtpu: 0.0.40
codegen_flags: <defaults>
</compile_context>

<pallas_src>
import functools

import numpy as np
import jax
import jax.numpy as jnp
from jax.experimental import pallas as pl
from jax.experimental.pallas import tpu as pltpu

EPS = 1e-5
VMEM_LIMIT = 48 * 1024 * 1024   # <= 64 MiB physical on v7x; fine on v5e/v6e.


def _round_up(v: int, m: int) -> int:
    return (v + m - 1) // m * m


def _pick_tm(n: int, cap: int = 2048) -> int:
    """Largest row tile of the per-image token dim N: must divide N, and be
    either a multiple of 128 (lane-dense transposed logit stores) or N itself."""
    if n <= cap:
        return n
    best = 0
    for d in range(128, cap + 1, 128):
        if n % d == 0:
            best = d
    return best if best else n   # fallback: whole image per grid step


# ----------------------------- Kernel 1 --------------------------------------
# conv1 (C -> 256) on a (TM, C) row tile, reduced immediately to per-tile
# channel sum / sum-of-squares partials (training-mode BatchNorm statistics).
# No padding -> no row masking needed.
def conv1_stats_kernel(x_ref, w1_ref, b1_ref, sum_ref, ssq_ref):
    y = jnp.dot(x_ref[0], w1_ref[...],
                preferred_element_type=jnp.float32) + b1_ref[...]
    sum_ref[0, 0] = jnp.sum(y, axis=0, keepdims=True)
    ssq_ref[0, 0] = jnp.sum(y * y, axis=0, keepdims=True)


# ----------------------------- Kernel 2 --------------------------------------
# Recompute conv1, apply folded BN scale/shift + ReLU in f32, conv2 (256 ->
# K_pad lanes) on the MXU, then transpose and store only the K real classes in
# a class-major (K, TM) bf16 tile (feeds the bilinear pass directly).
def bn_relu_conv2_kernel(x_ref, w1_ref, b1_ref, scale_ref, shift_ref,
                         w2_ref, b2_ref, z_ref, *, num_classes):
    y = jnp.dot(x_ref[0], w1_ref[...],
                preferred_element_type=jnp.float32) + b1_ref[...]
    h = jnp.maximum(y * scale_ref[...] + shift_ref[...], 0.0)
    z = jnp.dot(h.astype(jnp.bfloat16), w2_ref[...],
                preferred_element_type=jnp.float32) + b2_ref[...]
    zt = jnp.transpose(z)                      # (K_pad, TM), small XLU transpose
    z_ref[0] = zt[:num_classes, :].astype(jnp.bfloat16)


# ----------------------------- Kernel 3 --------------------------------------
# Bilinear upsample (align_corners=False) of one (H, W) class plane:
#   out = Rh @ (plane @ Rw^T).  Both GEMMs are bf16 with f32 accumulation and
# lane-dense (Ws-wide) outputs; the (Hs, Ws) store is unmasked f32.
def bilinear_kernel(z_ref, rwt_ref, rh_ref, o_ref):
    img = z_ref[0, 0]                                                 # (H, W)
    t = jnp.dot(img, rwt_ref[...], preferred_element_type=jnp.float32)  # (H, Ws)
    o_ref[0, 0] = jnp.dot(rh_ref[...], t.astype(jnp.bfloat16),
                          preferred_element_type=jnp.float32)         # (Hs, Ws)


def _bilinear_matrix(out_size: int, in_size: int) -> np.ndarray:
    """PyTorch F.interpolate(mode='bilinear', align_corners=False) row weights."""
    R = np.zeros((out_size, in_size), dtype=np.float32)
    scale = in_size / out_size
    for i in range(out_size):
        src = (i + 0.5) * scale - 0.5
        src = max(src, 0.0)
        i0 = min(int(np.floor(src)), in_size - 1)
        i1 = min(i0 + 1, in_size - 1)
        lam = src - i0
        R[i, i0] += 1.0 - lam
        R[i, i1] += lam
    return R


@functools.partial(jax.jit, static_argnames=("image_size", "patch_size"))
def setr_naive_decoder(x, params, *, image_size, patch_size):
    """x: (B, N, C) float32.  Returns (B, num_classes, Hs, Ws) float32 (NCHW)."""
    w1, b1, gamma, beta, w2, b2 = params
    B, N, C = x.shape
    Hs, Ws = image_size
    H, W = Hs // patch_size, Ws // patch_size
    assert N == H * W
    C_mid = w1.shape[1]
    K = w2.shape[1]
    K_pad = _round_up(K, 128)          # lane-dense conv2 MXU output
    M = B * N

    TM = _pick_tm(N)                   # batch-aligned row tile (divides N)
    G = N // TM

    # bf16 matmul operands, f32 accumulation; elementwise math stays f32.
    x_bf = x.astype(jnp.bfloat16)                                   # (B, N, C)
    w1_bf = w1.astype(jnp.bfloat16)
    b1_r = b1.reshape(1, C_mid).astype(jnp.float32)
    w2_bf = jnp.pad(w2, ((0, 0), (0, K_pad - K))).astype(jnp.bfloat16)
    b2_r = jnp.pad(b2, (0, K_pad - K)).reshape(1, K_pad).astype(jnp.float32)

    # --- pass 1: conv1 + per-tile batch statistics (no activation round-trip) ---
    part_sum, part_ssq = pl.pallas_call(
        conv1_stats_kernel,
        out_shape=(
            jax.ShapeDtypeStruct((B, G, 1, C_mid), jnp.float32),
            jax.ShapeDtypeStruct((B, G, 1, C_mid), jnp.float32),
        ),
        grid_spec=pltpu.PrefetchScalarGridSpec(
            num_scalar_prefetch=0,
            grid=(B, G),
            in_specs=[
                pl.BlockSpec((1, TM, C), lambda b, g: (b, g, 0)),
                pl.BlockSpec((C, C_mid), lambda b, g: (0, 0)),
                pl.BlockSpec((1, C_mid), lambda b, g: (0, 0)),
            ],
            out_specs=[
                pl.BlockSpec((1, 1, 1, C_mid), lambda b, g: (b, g, 0, 0)),
                pl.BlockSpec((1, 1, 1, C_mid), lambda b, g: (b, g, 0, 0)),
            ],
        ),
        compiler_params=pltpu.CompilerParams(
            dimension_semantics=("parallel", "parallel"),
            vmem_limit_bytes=VMEM_LIMIT),
    )(x_bf, w1_bf, b1_r)

    # Training-mode BatchNorm (biased variance) folded to a per-channel affine.
    ssum = jnp.sum(part_sum, axis=(0, 1, 2))
    ssq = jnp.sum(part_ssq, axis=(0, 1, 2))
    mean = ssum / M
    var = jnp.maximum(ssq / M - mean * mean, 0.0)
    inv_std = gamma / jnp.sqrt(var + EPS)
    scale = inv_std.reshape(1, C_mid).astype(jnp.float32)
    shift = (beta - mean * inv_std).reshape(1, C_mid).astype(jnp.float32)

    # --- pass 2: conv1 (recomputed) + BN + ReLU + conv2, stored class-major ---
    z_cls = pl.pallas_call(
        functools.partial(bn_relu_conv2_kernel, num_classes=K),
        out_shape=jax.ShapeDtypeStruct((B, K, N), jnp.bfloat16),
        grid_spec=pltpu.PrefetchScalarGridSpec(
            num_scalar_prefetch=0,
            grid=(B, G),
            in_specs=[
                pl.BlockSpec((1, TM, C), lambda b, g: (b, g, 0)),
                pl.BlockSpec((C, C_mid), lambda b, g: (0, 0)),
                pl.BlockSpec((1, C_mid), lambda b, g: (0, 0)),
                pl.BlockSpec((1, C_mid), lambda b, g: (0, 0)),
                pl.BlockSpec((1, C_mid), lambda b, g: (0, 0)),
                pl.BlockSpec((C_mid, K_pad), lambda b, g: (0, 0)),
                pl.BlockSpec((1, K_pad), lambda b, g: (0, 0)),
            ],
            out_specs=pl.BlockSpec((1, K, TM), lambda b, g: (b, 0, g)),
        ),
        compiler_params=pltpu.CompilerParams(
            dimension_semantics=("parallel", "parallel"),
            vmem_limit_bytes=VMEM_LIMIT),
    )(x_bf, w1_bf, b1_r, scale, shift, w2_bf, b2_r)

    # --- pass 3: bilinear upsample to image_size (align_corners=False) ---
    # z_cls is already NCHW-ordered; the reshape only splits the last dim (free).
    z_nchw = z_cls.reshape(B, K, H, W)
    Rh = jnp.asarray(_bilinear_matrix(Hs, H), dtype=jnp.bfloat16)    # (Hs, H)
    RwT = jnp.asarray(_bilinear_matrix(Ws, W).T, dtype=jnp.bfloat16)  # (W, Ws)

    out = pl.pallas_call(
        bilinear_kernel,
        out_shape=jax.ShapeDtypeStruct((B, K, Hs, Ws), jnp.float32),
        grid_spec=pltpu.PrefetchScalarGridSpec(
            num_scalar_prefetch=0,
            grid=(B, K),
            in_specs=[
                pl.BlockSpec((1, 1, H, W), lambda b, k: (b, k, 0, 0)),
                pl.BlockSpec((W, Ws), lambda b, k: (0, 0)),
                pl.BlockSpec((Hs, H), lambda b, k: (0, 0)),
            ],
            out_specs=pl.BlockSpec((1, 1, Hs, Ws), lambda b, k: (b, k, 0, 0)),
        ),
        compiler_params=pltpu.CompilerParams(
            dimension_semantics=("parallel", "parallel"),
            vmem_limit_bytes=VMEM_LIMIT),
    )(z_nchw, RwT, Rh)

    return out


def reference(x, params, *, image_size, patch_size):
    """Pure-JAX f32 reference mirroring the PyTorch forward (training-mode BN)."""
    w1, b1, gamma, beta, w2, b2 = params
    B, N, C = x.shape
    Hs, Ws = image_size
    H, W = Hs // patch_size, Ws // patch_size
    K = w2.shape[1]
    xf = x.reshape(B * N, C)
    y = xf @ w1 + b1
    mean = y.mean(axis=0)
    var = y.var(axis=0)  # biased, as BN uses for normalization
    h = jnp.maximum((y - mean) / jnp.sqrt(var + EPS) * gamma + beta, 0.0)
    z = (h @ w2 + b2).reshape(B, H, W, K).transpose(0, 3, 1, 2)
    Rh = jnp.asarray(_bilinear_matrix(Hs, H))
    Rw = jnp.asarray(_bilinear_matrix(Ws, W))
    return jnp.einsum("oh,bkhw,pw->bkop", Rh, z, Rw)


if __name__ == "__main__":
    # Small shapes consistent with the module: input_dim=32, num_classes=5,
    # image_size=(16,16), patch_size=4  =>  output_size=(4,4), N=16.
    B, C, K = 2, 32, 5
    image_size, patch_size = (16, 16), 4
    H = image_size[0] // patch_size
    W = image_size[1] // patch_size
    N = H * W
    C_mid = 256

    key = jax.random.PRNGKey(0)
    kx, k1, k2, k3, k4, k5, k6 = jax.random.split(key, 7)

    x = jax.random.normal(kx, (B, N, C), dtype=jnp.float32)
    params = (
        0.05 * jax.random.normal(k1, (C, C_mid), dtype=jnp.float32),      # conv1 weight
        0.05 * jax.random.normal(k2, (C_mid,), dtype=jnp.float32),        # conv1 bias
        1.0 + 0.1 * jax.random.normal(k3, (C_mid,), dtype=jnp.float32),   # BN gamma
        0.1 * jax.random.normal(k4, (C_mid,), dtype=jnp.float32),         # BN beta
        0.05 * jax.random.normal(k5, (C_mid, K), dtype=jnp.float32),      # conv2 weight
        0.05 * jax.random.normal(k6, (K,), dtype=jnp.float32),            # conv2 bias
    )

    out = setr_naive_decoder(x, params, image_size=image_size, patch_size=patch_size)
    out = jax.block_until_ready(out)

    ref = reference(x, params, image_size=image_size, patch_size=patch_size)
    assert out.shape == (B, K, image_size[0], image_size[1])
    np.testing.assert_allclose(np.asarray(out), np.asarray(ref), rtol=5e-2, atol=5e-2)

    print("KERNEL_OK")
</pallas_src>

<mosaic_0001>
module attributes {stable_mosaic.version = 11 : i64} {
  func.func @conv1_stats_kernel(%arg0: i32, %arg1: i32, %arg2: memref<1x16x32xbf16, #tpu.memory_space<vmem>>, %arg3: memref<32x256xbf16, #tpu.memory_space<vmem>>, %arg4: memref<1x256xf32, #tpu.memory_space<vmem>>, %arg5: memref<1x1x1x256xf32, #tpu.memory_space<vmem>>, %arg6: memref<1x1x1x256xf32, #tpu.memory_space<vmem>>) attributes {dimension_semantics = [#tpu.dimension_semantics<parallel>, #tpu.dimension_semantics<parallel>], iteration_bounds = array<i64: 2, 1>, scalar_prefetch = 0 : i64, scratch_operands = 0 : i64, tpu.core_type = #tpu.core_type<tc>, window_params = [{transform_indices = @transform_0, window_bounds = array<i64: 1, 16, 32>}, {pipeline_mode = #tpu.pipeline_mode<synchronous>, transform_indices = @transform_1, window_bounds = array<i64: 32, 256>}, {pipeline_mode = #tpu.pipeline_mode<synchronous>, transform_indices = @transform_2, window_bounds = array<i64: 1, 256>}, {transform_indices = @transform_3, window_bounds = array<i64: 1, 1, 1, 256>}, {transform_indices = @transform_4, window_bounds = array<i64: 1, 1, 1, 256>}]} {
    %c0 = arith.constant 0 : index
    %c0_0 = arith.constant 0 : index
    %c0_1 = arith.constant 0 : index
    %0 = vector.load %arg2[%c0, %c0_0, %c0_1] : memref<1x16x32xbf16, #tpu.memory_space<vmem>>, vector<1x16x32xbf16>
    %1 = vector.shape_cast %0 : vector<1x16x32xbf16> to vector<16x32xbf16>
    %c0_2 = arith.constant 0 : index
    %c0_3 = arith.constant 0 : index
    %2 = vector.load %arg3[%c0_2, %c0_3] : memref<32x256xbf16, #tpu.memory_space<vmem>>, vector<32x256xbf16>
    %cst = arith.constant dense<0.000000e+00> : vector<16x256xf32>
    %3 = tpu.matmul %1, %2, %cst {dimension_numbers = #tpu.dot_dimension_numbers<[1], [0], [0], [1], [0, 0, 1, 1], [], []>} : vector<16x32xbf16>, vector<32x256xbf16>, vector<16x256xf32> -> vector<16x256xf32>
    %c0_4 = arith.constant 0 : index
    %c0_5 = arith.constant 0 : index
    %4 = vector.load %arg4[%c0_4, %c0_5] : memref<1x256xf32, #tpu.memory_space<vmem>>, vector<1x256xf32>
    %5 = vector.broadcast %4 : vector<1x256xf32> to vector<16x256xf32>
    %6 = arith.addf %3, %5 : vector<16x256xf32>
    %cst_6 = arith.constant dense<0.000000e+00> : vector<256xf32>
    %7 = vector.multi_reduction <add>, %6, %cst_6 [0] : vector<16x256xf32> to vector<256xf32>
    %8 = vector.shape_cast %7 : vector<256xf32> to vector<1x256xf32>
    %c0_7 = arith.constant 0 : index
    %c0_8 = arith.constant 0 : index
    %c0_9 = arith.constant 0 : index
    %c0_10 = arith.constant 0 : index
    %9 = vector.load %arg5[%c0_7, %c0_8, %c0_9, %c0_10] : memref<1x1x1x256xf32, #tpu.memory_space<vmem>>, vector<1x1x1x256xf32>
    %10 = vector.shape_cast %9 : vector<1x1x1x256xf32> to vector<1x256xf32>
    %11 = vector.shape_cast %8 : vector<1x256xf32> to vector<1x1x1x256xf32>
    tpu.vector_store %arg5[%c0_7, %c0_8, %c0_9, %c0_10], %11 {strides = array<i32>} : memref<1x1x1x256xf32, #tpu.memory_space<vmem>>, vector<1x1x1x256xf32>,
    %12 = arith.mulf %6, %6 : vector<16x256xf32>
    %cst_11 = arith.constant dense<0.000000e+00> : vector<256xf32>
    %13 = vector.multi_reduction <add>, %12, %cst_11 [0] : vector<16x256xf32> to vector<256xf32>
    %14 = vector.shape_cast %13 : vector<256xf32> to vector<1x256xf32>
    %c0_12 = arith.constant 0 : index
    %c0_13 = arith.constant 0 : index
    %c0_14 = arith.constant 0 : index
    %c0_15 = arith.constant 0 : index
    %15 = vector.load %arg6[%c0_12, %c0_13, %c0_14, %c0_15] : memref<1x1x1x256xf32, #tpu.memory_space<vmem>>, vector<1x1x1x256xf32>
    %16 = vector.shape_cast %15 : vector<1x1x1x256xf32> to vector<1x256xf32>
    %17 = vector.shape_cast %14 : vector<1x256xf32> to vector<1x1x1x256xf32>
    tpu.vector_store %arg6[%c0_12, %c0_13, %c0_14, %c0_15], %17 {strides = array<i32>} : memref<1x1x1x256xf32, #tpu.memory_space<vmem>>, vector<1x1x1x256xf32>,
    return
  }
  func.func @transform_0(%arg0: i32, %arg1: i32) -> (i32, i32, i32) {
    %c0_i32 = arith.constant 0 : i32
    %c0_i32_0 = arith.constant 0 : i32
    return %arg0, %arg1, %c0_i32 : i32, i32, i32
  }
  func.func @transform_1(%arg0: i32, %arg1: i32) -> (i32, i32) {
    %c0_i32 = arith.constant 0 : i32
    %c0_i32_0 = arith.constant 0 : i32
    %c0_i32_1 = arith.constant 0 : i32
    return %c0_i32, %c0_i32_0 : i32, i32
  }
  func.func @transform_2(%arg0: i32, %arg1: i32) -> (i32, i32) {
    %c0_i32 = arith.constant 0 : i32
    %c0_i32_0 = arith.constant 0 : i32
    %c0_i32_1 = arith.constant 0 : i32
    return %c0_i32, %c0_i32_0 : i32, i32
  }
  func.func @transform_3(%arg0: i32, %arg1: i32) -> (i32, i32, i32, i32) {
    %c0_i32 = arith.constant 0 : i32
    %c0_i32_0 = arith.constant 0 : i32
    %c0_i32_1 = arith.constant 0 : i32
    return %arg0, %arg1, %c0_i32, %c0_i32_0 : i32, i32, i32, i32
  }
  func.func @transform_4(%arg0: i32, %arg1: i32) -> (i32, i32, i32, i32) {
    %c0_i32 = arith.constant 0 : i32
    %c0_i32_0 = arith.constant 0 : i32
    %c0_i32_1 = arith.constant 0 : i32
    return %arg0, %arg1, %c0_i32, %c0_i32_0 : i32, i32, i32, i32
  }
}

module attributes {stable_mosaic.version = 11 : i64} {
  func.func @bn_relu_conv2_kernel(%arg0: i32, %arg1: i32, %arg2: memref<1x16x32xbf16, #tpu.memory_space<vmem>>, %arg3: memref<32x256xbf16, #tpu.memory_space<vmem>>, %arg4: memref<1x256xf32, #tpu.memory_space<vmem>>, %arg5: memref<1x256xf32, #tpu.memory_space<vmem>>, %arg6: memref<1x256xf32, #tpu.memory_space<vmem>>, %arg7: memref<256x128xbf16, #tpu.memory_space<vmem>>, %arg8: memref<1x128xf32, #tpu.memory_space<vmem>>, %arg9: memref<1x5x16xbf16, #tpu.memory_space<vmem>>) attributes {dimension_semantics = [#tpu.dimension_semantics<parallel>, #tpu.dimension_semantics<parallel>], iteration_bounds = array<i64: 2, 1>, scalar_prefetch = 0 : i64, scratch_operands = 0 : i64, tpu.core_type = #tpu.core_type<tc>, window_params = [{transform_indices = @transform_0, window_bounds = array<i64: 1, 16, 32>}, {pipeline_mode = #tpu.pipeline_mode<synchronous>, transform_indices = @transform_1, window_bounds = array<i64: 32, 256>}, {pipeline_mode = #tpu.pipeline_mode<synchronous>, transform_indices = @transform_2, window_bounds = array<i64: 1, 256>}, {pipeline_mode = #tpu.pipeline_mode<synchronous>, transform_indices = @transform_3, window_bounds = array<i64: 1, 256>}, {pipeline_mode = #tpu.pipeline_mode<synchronous>, transform_indices = @transform_4, window_bounds = array<i64: 1, 256>}, {pipeline_mode = #tpu.pipeline_mode<synchronous>, transform_indices = @transform_5, window_bounds = array<i64: 256, 128>}, {pipeline_mode = #tpu.pipeline_mode<synchronous>, transform_indices = @transform_6, window_bounds = array<i64: 1, 128>}, {transform_indices = @transform_7, window_bounds = array<i64: 1, 5, 16>}]} {
    %c0 = arith.constant 0 : index
    %c0_0 = arith.constant 0 : index
    %c0_1 = arith.constant 0 : index
    %0 = vector.load %arg2[%c0, %c0_0, %c0_1] : memref<1x16x32xbf16, #tpu.memory_space<vmem>>, vector<1x16x32xbf16>
    %1 = vector.shape_cast %0 : vector<1x16x32xbf16> to vector<16x32xbf16>
    %c0_2 = arith.constant 0 : index
    %c0_3 = arith.constant 0 : index
    %2 = vector.load %arg3[%c0_2, %c0_3] : memref<32x256xbf16, #tpu.memory_space<vmem>>, vector<32x256xbf16>
    %cst = arith.constant dense<0.000000e+00> : vector<16x256xf32>
    %3 = tpu.matmul %1, %2, %cst {dimension_numbers = #tpu.dot_dimension_numbers<[1], [0], [0], [1], [0, 0, 1, 1], [], []>} : vector<16x32xbf16>, vector<32x256xbf16>, vector<16x256xf32> -> vector<16x256xf32>
    %c0_4 = arith.constant 0 : index
    %c0_5 = arith.constant 0 : index
    %4 = vector.load %arg4[%c0_4, %c0_5] : memref<1x256xf32, #tpu.memory_space<vmem>>, vector<1x256xf32>
    %5 = vector.broadcast %4 : vector<1x256xf32> to vector<16x256xf32>
    %6 = arith.addf %3, %5 : vector<16x256xf32>
    %c0_6 = arith.constant 0 : index
    %c0_7 = arith.constant 0 : index
    %7 = vector.load %arg5[%c0_6, %c0_7] : memref<1x256xf32, #tpu.memory_space<vmem>>, vector<1x256xf32>
    %8 = vector.broadcast %7 : vector<1x256xf32> to vector<16x256xf32>
    %9 = arith.mulf %6, %8 : vector<16x256xf32>
    %c0_8 = arith.constant 0 : index
    %c0_9 = arith.constant 0 : index
    %10 = vector.load %arg6[%c0_8, %c0_9] : memref<1x256xf32, #tpu.memory_space<vmem>>, vector<1x256xf32>
    %11 = vector.broadcast %10 : vector<1x256xf32> to vector<16x256xf32>
    %12 = arith.addf %9, %11 : vector<16x256xf32>
    %cst_10 = arith.constant 0.000000e+00 : f32
    %13 = vector.broadcast %cst_10 : f32 to vector<16x256xf32>
    %14 = arith.maximumf %12, %13 : vector<16x256xf32>
    %15 = arith.truncf %14 : vector<16x256xf32> to vector<16x256xbf16>
    %c0_11 = arith.constant 0 : index
    %c0_12 = arith.constant 0 : index
    %16 = vector.load %arg7[%c0_11, %c0_12] : memref<256x128xbf16, #tpu.memory_space<vmem>>, vector<256x128xbf16>
    %cst_13 = arith.constant dense<0.000000e+00> : vector<16x128xf32>
    %17 = tpu.matmul %15, %16, %cst_13 {dimension_numbers = #tpu.dot_dimension_numbers<[1], [0], [0], [1], [0, 0, 1, 1], [], []>} : vector<16x256xbf16>, vector<256x128xbf16>, vector<16x128xf32> -> vector<16x128xf32>
    %c0_14 = arith.constant 0 : index
    %c0_15 = arith.constant 0 : index
    %18 = vector.load %arg8[%c0_14, %c0_15] : memref<1x128xf32, #tpu.memory_space<vmem>>, vector<1x128xf32>
    %19 = vector.broadcast %18 : vector<1x128xf32> to vector<16x128xf32>
    %20 = arith.addf %17, %19 : vector<16x128xf32>
    %21 = tpu.transpose %20, [1, 0] : vector<16x128xf32> -> vector<128x16xf32>
    %22 = vector.extract_strided_slice %21 {offsets = [0, 0], sizes = [5, 16], strides = [1, 1]} : vector<128x16xf32> to vector<5x16xf32>
    %23 = arith.truncf %22 : vector<5x16xf32> to vector<5x16xbf16>
    %c0_16 = arith.constant 0 : index
    %c0_17 = arith.constant 0 : index
    %c0_18 = arith.constant 0 : index
    %24 = vector.load %arg9[%c0_16, %c0_17, %c0_18] : memref<1x5x16xbf16, #tpu.memory_space<vmem>>, vector<1x5x16xbf16>
    %25 = vector.shape_cast %24 : vector<1x5x16xbf16> to vector<5x16xbf16>
    %26 = vector.shape_cast %23 : vector<5x16xbf16> to vector<1x5x16xbf16>
    tpu.vector_store %arg9[%c0_16, %c0_17, %c0_18], %26 {strides = array<i32>} : memref<1x5x16xbf16, #tpu.memory_space<vmem>>, vector<1x5x16xbf16>,
    return
  }
  func.func @transform_0(%arg0: i32, %arg1: i32) -> (i32, i32, i32) {
    %c0_i32 = arith.constant 0 : i32
    %c0_i32_0 = arith.constant 0 : i32
    return %arg0, %arg1, %c0_i32 : i32, i32, i32
  }
  func.func @transform_1(%arg0: i32, %arg1: i32) -> (i32, i32) {
    %c0_i32 = arith.constant 0 : i32
    %c0_i32_0 = arith.constant 0 : i32
    %c0_i32_1 = arith.constant 0 : i32
    return %c0_i32, %c0_i32_0 : i32, i32
  }
  func.func @transform_2(%arg0: i32, %arg1: i32) -> (i32, i32) {
    %c0_i32 = arith.constant 0 : i32
    %c0_i32_0 = arith.constant 0 : i32
    %c0_i32_1 = arith.constant 0 : i32
    return %c0_i32, %c0_i32_0 : i32, i32
  }
  func.func @transform_3(%arg0: i32, %arg1: i32) -> (i32, i32) {
    %c0_i32 = arith.constant 0 : i32
    %c0_i32_0 = arith.constant 0 : i32
    %c0_i32_1 = arith.constant 0 : i32
    return %c0_i32, %c0_i32_0 : i32, i32
  }
  func.func @transform_4(%arg0: i32, %arg1: i32) -> (i32, i32) {
    %c0_i32 = arith.constant 0 : i32
    %c0_i32_0 = arith.constant 0 : i32
    %c0_i32_1 = arith.constant 0 : i32
    return %c0_i32, %c0_i32_0 : i32, i32
  }
  func.func @transform_5(%arg0: i32, %arg1: i32) -> (i32, i32) {
    %c0_i32 = arith.constant 0 : i32
    %c0_i32_0 = arith.constant 0 : i32
    %c0_i32_1 = arith.constant 0 : i32
    return %c0_i32, %c0_i32_0 : i32, i32
  }
  func.func @transform_6(%arg0: i32, %arg1: i32) -> (i32, i32) {
    %c0_i32 = arith.constant 0 : i32
    %c0_i32_0 = arith.constant 0 : i32
    %c0_i32_1 = arith.constant 0 : i32
    return %c0_i32, %c0_i32_0 : i32, i32
  }
  func.func @transform_7(%arg0: i32, %arg1: i32) -> (i32, i32, i32) {
    %c0_i32 = arith.constant 0 : i32
    %c0_i32_0 = arith.constant 0 : i32
    return %arg0, %c0_i32, %arg1 : i32, i32, i32
  }
}

module attributes {stable_mosaic.version = 11 : i64} {
  func.func @bilinear_kernel(%arg0: i32, %arg1: i32, %arg2: memref<1x1x4x4xbf16, #tpu.memory_space<vmem>>, %arg3: memref<4x16xbf16, #tpu.memory_space<vmem>>, %arg4: memref<16x4xbf16, #tpu.memory_space<vmem>>, %arg5: memref<1x1x16x16xf32, #tpu.memory_space<vmem>>) attributes {dimension_semantics = [#tpu.dimension_semantics<parallel>, #tpu.dimension_semantics<parallel>], iteration_bounds = array<i64: 2, 5>, scalar_prefetch = 0 : i64, scratch_operands = 0 : i64, tpu.core_type = #tpu.core_type<tc>, window_params = [{transform_indices = @transform_0, window_bounds = array<i64: 1, 1, 4, 4>}, {pipeline_mode = #tpu.pipeline_mode<synchronous>, transform_indices = @transform_1, window_bounds = array<i64: 4, 16>}, {pipeline_mode = #tpu.pipeline_mode<synchronous>, transform_indices = @transform_2, window_bounds = array<i64: 16, 4>}, {transform_indices = @transform_3, window_bounds = array<i64: 1, 1, 16, 16>}]} {
    %c0 = arith.constant 0 : index
    %c0_0 = arith.constant 0 : index
    %c0_1 = arith.constant 0 : index
    %c0_2 = arith.constant 0 : index
    %0 = vector.load %arg2[%c0, %c0_0, %c0_1, %c0_2] : memref<1x1x4x4xbf16, #tpu.memory_space<vmem>>, vector<1x1x4x4xbf16>
    %1 = vector.shape_cast %0 : vector<1x1x4x4xbf16> to vector<4x4xbf16>
    %c0_3 = arith.constant 0 : index
    %c0_4 = arith.constant 0 : index
    %2 = vector.load %arg3[%c0_3, %c0_4] : memref<4x16xbf16, #tpu.memory_space<vmem>>, vector<4x16xbf16>
    %cst = arith.constant dense<0.000000e+00> : vector<4x16xf32>
    %3 = tpu.matmul %1, %2, %cst {dimension_numbers = #tpu.dot_dimension_numbers<[1], [0], [0], [1], [0, 0, 1, 1], [], []>} : vector<4x4xbf16>, vector<4x16xbf16>, vector<4x16xf32> -> vector<4x16xf32>
    %c0_5 = arith.constant 0 : index
    %c0_6 = arith.constant 0 : index
    %4 = vector.load %arg4[%c0_5, %c0_6] : memref<16x4xbf16, #tpu.memory_space<vmem>>, vector<16x4xbf16>
    %5 = arith.truncf %3 : vector<4x16xf32> to vector<4x16xbf16>
    %cst_7 = arith.constant dense<0.000000e+00> : vector<16x16xf32>
    %6 = tpu.matmul %4, %5, %cst_7 {dimension_numbers = #tpu.dot_dimension_numbers<[1], [0], [0], [1], [0, 0, 1, 1], [], []>} : vector<16x4xbf16>, vector<4x16xbf16>, vector<16x16xf32> -> vector<16x16xf32>
    %c0_8 = arith.constant 0 : index
    %c0_9 = arith.constant 0 : index
    %c0_10 = arith.constant 0 : index
    %c0_11 = arith.constant 0 : index
    %7 = vector.load %arg5[%c0_8, %c0_9, %c0_10, %c0_11] : memref<1x1x16x16xf32, #tpu.memory_space<vmem>>, vector<1x1x16x16xf32>
    %8 = vector.shape_cast %7 : vector<1x1x16x16xf32> to vector<16x16xf32>
    %9 = vector.shape_cast %6 : vector<16x16xf32> to vector<1x1x16x16xf32>
    tpu.vector_store %arg5[%c0_8, %c0_9, %c0_10, %c0_11], %9 {strides = array<i32>} : memref<1x1x16x16xf32, #tpu.memory_space<vmem>>, vector<1x1x16x16xf32>,
    return
  }
  func.func @transform_0(%arg0: i32, %arg1: i32) -> (i32, i32, i32, i32) {
    %c0_i32 = arith.constant 0 : i32
    %c0_i32_0 = arith.constant 0 : i32
    %c0_i32_1 = arith.constant 0 : i32
    return %arg0, %arg1, %c0_i32, %c0_i32_0 : i32, i32, i32, i32
  }
  func.func @transform_1(%arg0: i32, %arg1: i32) -> (i32, i32) {
    %c0_i32 = arith.constant 0 : i32
    %c0_i32_0 = arith.constant 0 : i32
    %c0_i32_1 = arith.constant 0 : i32
    return %c0_i32, %c0_i32_0 : i32, i32
  }
  func.func @transform_2(%arg0: i32, %arg1: i32) -> (i32, i32) {
    %c0_i32 = arith.constant 0 : i32
    %c0_i32_0 = arith.constant 0 : i32
    %c0_i32_1 = arith.constant 0 : i32
    return %c0_i32, %c0_i32_0 : i32, i32
  }
  func.func @transform_3(%arg0: i32, %arg1: i32) -> (i32, i32, i32, i32) {
    %c0_i32 = arith.constant 0 : i32
    %c0_i32_0 = arith.constant 0 : i32
    %c0_i32_1 = arith.constant 0 : i32
    return %arg0, %arg1, %c0_i32, %c0_i32_0 : i32, i32, i32, i32
  }
}

</mosaic_0001>

<llo_original>
// kernel: setr_naive_decoder.3
$region0: #{setr_naive_decoder.3}
  #allocation0 [shape = 'u32[]', space=smem, size = 0x4, offset = 0x4, fixed_abs, tag = 'smem constant byte address 0x4 - core index']
  #allocation1 [shape = 'u32[72,128]{1,0:T(1,128)}', space=vmem, size = 0x9000, scoped, tag = 'internal scratch']
  %s0 = inlined_call_operand.vmem [shape: bf16[2,16,32], index: 0, kind: input, shape index: {}]
  %s1 = inlined_call_operand.vmem [shape: bf16[32,256], index: 1, kind: input, shape index: {}]
  %s2 = inlined_call_operand.vmem [shape: f32[1,256], index: 2, kind: input, shape index: {}]
  %s3 = inlined_call_operand.vmem [shape: f32[2,1,1,256], index: 3, kind: output, shape index: {0}]
  %s4 = inlined_call_operand.vmem [shape: f32[2,1,1,256], index: 4, kind: output, shape index: {1}]
  %5 = xla_tuple %s3, %s4
  %s6 = sld [smem:[#allocation0]]
  $region53: #{setr_naive_decoder.3} parent=0
    _
  %s8 = ssub.s32 1, %s6
  %s9 = scalar_select 0, %s8, %s6
  loop: start=0, step=1, limit=4
  $region2: #{setr_naive_decoder.3} parent=0 // loop_pre_header
    _
  $region3: #{setr_naive_decoder.3} parent=0 // loop_header
    %s11 = sphi 0, %s15
    %p12 = scmp.ge.s32.totalorder %s11, 4
    %s18 = sphi 0, %s30
    %s19 = sphi 0, %s26
    %s20 = sphi 0, %s18
    %s21 = sphi 0, %s19
    %s22 = sphi 0, %s20
    %s23 = sphi 0, %s21
    %s35 = sphi 0, %s37
    %s38 = sphi 0, %s35
    %s39 = sphi 0, %s38
    %s55 = sphi 0, %s39
    %s59 = sphi 0, %s59
    %s61 = sphi 0, %s59
    %s62 = sphi 0, %s61
    %s76 = sphi 0, %s62
    %s80 = sphi 0, %s80
    %s82 = sphi 0, %s80
    %s83 = sphi 0, %s82
    %s97 = sphi 0, %s83
    %s105 = sphi 0, %s107
    %s108 = sphi 0, %s105
    %s109 = sphi 0, %s108
    %s125 = sphi 0, %s109
    %s133 = sphi 0, %s135
    %s136 = sphi 0, %s133
    %s137 = sphi 0, %s136
    %s153 = sphi 0, %s137
  $region4: #{setr_naive_decoder.3} parent=0 // loop_header_branch
    %14 = sbr.rel (%p12) target = $region8
  $region5: #{setr_naive_decoder.3} parent=0 // loop_body
    %s16 = ssub.s32 %s11, 1
    %s17 = ssub.s32 %s11, 2
    %s24 = sadd.s32 1, %s19
    %p25 = scmp.ge.s32.totalorder %s24, 1
    %s26 = scalar_select %p25, 0, %s24
    %s27 = sadd.s32 1, %s18
    %s28 = scalar_select %p25, %s27, %s18
    %p29 = scmp.ge.s32.totalorder %s28, 2
    %s30 = scalar_select %p29, 0, %s28
    %s31 = ssub.s32 %s18, %s30
    %s32 = ssub.s32 %s19, %s26
    %s33 = sor.u32 %s31, %s32
    %p34 = scmp.eq.s32.totalorder %s33, 0
    %s36 = sadd.s32 %s35, 1
    %s37 = scalar_select %p34, %s35, %s36
    %p40 = pneg %p34
    %p41 = scmp.eq.s32.totalorder %s11, 1
    %p42 = por %p40, %p41
    %p43 = scmp.ne.s32.totalorder %s35, %s38
    %p44 = scmp.eq.s32.totalorder %s11, 0
    %p45 = por %p43, %p44
    %p46 = scmp.ne.s32.totalorder %s35, %s38
    %p47 = scmp.eq.s32.totalorder %s16, 1
    %p48 = por %p46, %p47
    %p49 = scmp.ne.s32.totalorder %s38, %s39
    %p50 = scmp.eq.s32.totalorder %s16, 0
    %p51 = por %p49, %p50
    %p52 = scmp.ne.s32.totalorder %s38, %s39
    %p53 = scmp.eq.s32.totalorder %s17, 1
    %p54 = por %p52, %p53
    %p56 = scmp.ne.s32.totalorder %s39, %s55
    %p57 = scmp.eq.s32.totalorder %s17, 0
    %p58 = por %p56, %p57
    %s60 = sadd.s32 %s59, 1
    %p63 = scmp.eq.s32.totalorder %s11, 1
    %p64 = scmp.ne.s32.totalorder %s59, %s61
    %p65 = scmp.eq.s32.totalorder %s11, 0
    %p66 = por %p64, %p65
    %p67 = scmp.ne.s32.totalorder %s59, %s61
    %p68 = scmp.eq.s32.totalorder %s16, 1
    %p69 = por %p67, %p68
    %p70 = scmp.ne.s32.totalorder %s61, %s62
    %p71 = scmp.eq.s32.totalorder %s16, 0
    %p72 = por %p70, %p71
    %p73 = scmp.ne.s32.totalorder %s61, %s62
    %p74 = scmp.eq.s32.totalorder %s17, 1
    %p75 = por %p73, %p74
    %p77 = scmp.ne.s32.totalorder %s62, %s76
    %p78 = scmp.eq.s32.totalorder %s17, 0
    %p79 = por %p77, %p78
    %s81 = sadd.s32 %s80, 1
    %p84 = scmp.eq.s32.totalorder %s11, 1
    %p85 = scmp.ne.s32.totalorder %s80, %s82
    %p86 = scmp.eq.s32.totalorder %s11, 0
    %p87 = por %p85, %p86
    %p88 = scmp.ne.s32.totalorder %s80, %s82
    %p89 = scmp.eq.s32.totalorder %s16, 1
    %p90 = por %p88, %p89
    %p91 = scmp.ne.s32.totalorder %s82, %s83
    %p92 = scmp.eq.s32.totalorder %s16, 0
    %p93 = por %p91, %p92
    %p94 = scmp.ne.s32.totalorder %s82, %s83
    %p95 = scmp.eq.s32.totalorder %s17, 1
    %p96 = por %p94, %p95
    %p98 = scmp.ne.s32.totalorder %s83, %s97
    %p99 = scmp.eq.s32.totalorder %s17, 0
    %p100 = por %p98, %p99
    %s101 = ssub.s32 %s18, %s30
    %s102 = ssub.s32 %s19, %s26
    %s103 = sor.u32 %s101, %s102
    %p104 = scmp.eq.s32.totalorder %s103, 0
    %s106 = sadd.s32 %s105, 1
    %s107 = scalar_select %p104, %s105, %s106
    %p110 = pneg %p104
    %p111 = scmp.eq.s32.totalorder %s11, 1
    %p112 = por %p110, %p111
    %p113 = scmp.ne.s32.totalorder %s105, %s108
    %p114 = scmp.eq.s32.totalorder %s11, 0
    %p115 = por %p113, %p114
    %p116 = scmp.ne.s32.totalorder %s105, %s108
    %p117 = scmp.eq.s32.totalorder %s16, 1
    %p118 = por %p116, %p117
    %p119 = scmp.ne.s32.totalorder %s108, %s109
    %p120 = scmp.eq.s32.totalorder %s16, 0
    %p121 = por %p119, %p120
    %p122 = scmp.ne.s32.totalorder %s108, %s109
    %p123 = scmp.eq.s32.totalorder %s17, 1
    %p124 = por %p122, %p123
    %p126 = scmp.ne.s32.totalorder %s109, %s125
    %p127 = scmp.eq.s32.totalorder %s17, 0
    %p128 = por %p126, %p127
    %s129 = ssub.s32 %s18, %s30
    %s130 = ssub.s32 %s19, %s26
    %s131 = sor.u32 %s129, %s130
    %p132 = scmp.eq.s32.totalorder %s131, 0
    %s134 = sadd.s32 %s133, 1
    %s135 = scalar_select %p132, %s133, %s134
    %p138 = pneg %p132
    %p139 = scmp.eq.s32.totalorder %s11, 1
    %p140 = por %p138, %p139
    %p141 = scmp.ne.s32.totalorder %s133, %s136
    %p142 = scmp.eq.s32.totalorder %s11, 0
    %p143 = por %p141, %p142
    %p144 = scmp.ne.s32.totalorder %s133, %s136
    %p145 = scmp.eq.s32.totalorder %s16, 1
    %p146 = por %p144, %p145
    %p147 = scmp.ne.s32.totalorder %s136, %s137
    %p148 = scmp.eq.s32.totalorder %s16, 0
    %p149 = por %p147, %p148
    %p150 = scmp.ne.s32.totalorder %s136, %s137
    %p151 = scmp.eq.s32.totalorder %s17, 1
    %p152 = por %p150, %p151
    %p154 = scmp.ne.s32.totalorder %s137, %s153
    %p155 = scmp.eq.s32.totalorder %s17, 0
    %p156 = por %p154, %p155
    %p157 = scmp.le.s32.totalorder 1, %s11
    %p158 = scmp.lt.s32.totalorder %s11, 3
    %p159 = pnand %p157, %p158
    %p160 = pneg %p159
    // Predicated region
    $region9: #{setr_naive_decoder.3} parent=5 // pred_check
      _
    $region10: #{setr_naive_decoder.3} parent=5 // pred_check_branch
      %162 = sbr.rel (%p159) target = $region12
    $region11: #{setr_naive_decoder.3} parent=5 // pred_region
      %s163 = ssub.s32 %s11, 1
      // Predicated region
      $region13: #{setr_naive_decoder.3} parent=11 // pred_check
        %p164 = pneg %p72
      $region14: #{setr_naive_decoder.3} parent=11 // pred_check_branch
        %166 = sbr.rel (%p164) target = $region16
      $region15: #{setr_naive_decoder.3} parent=11 // pred_region
        _
      $region16: #{setr_naive_decoder.3} parent=11 // pred_fallthru
        _
      // Predicated region
      $region17: #{setr_naive_decoder.3} parent=11 // pred_check
        %p167 = pneg %p93
      $region18: #{setr_naive_decoder.3} parent=11 // pred_check_branch
        %169 = sbr.rel (%p167) target = $region20
      $region19: #{setr_naive_decoder.3} parent=11 // pred_region
        _
      $region20: #{setr_naive_decoder.3} parent=11 // pred_fallthru
        _
    $region12: #{setr_naive_decoder.3} parent=5 // pred_fallthru
      _
    %p170 = scmp.lt.s32.totalorder %s11, 2
    // Predicated region
    $region21: #{setr_naive_decoder.3} parent=5 // pred_check
      %p171 = pneg %p170
    $region22: #{setr_naive_decoder.3} parent=5 // pred_check_branch
      %173 = sbr.rel (%p171) target = $region24
    $region23: #{setr_naive_decoder.3} parent=5 // pred_region
      // Predicated region
      $region25: #{setr_naive_decoder.3} parent=23 // pred_check
        %p174 = pneg %p45
      $region26: #{setr_naive_decoder.3} parent=23 // pred_check_branch
        %176 = sbr.rel (%p174) target = $region28
      $region27: #{setr_naive_decoder.3} parent=23 // pred_region
        %s177 = smul.u32 2, %s19
        %p178 = scmp.lt.s32.totalorder %s18, 1
        %s179 = scalar_select %p178, %s18, 1
        %p180 = scmp.lt.s32.totalorder %s177, 1
        %s181 = scalar_select %p180, %s177, 1
        %s182 = smul.addr %s179, 2
        %s183 = sadd.s32 %s181, %s182
        %s184 = smul.addr %s183, 4
        %s185 = scalar_lea.vmem %s0, %s184
        %s186 = smul.u32 2, %s19
      $region28: #{setr_naive_decoder.3} parent=23 // pred_fallthru
        _
    $region24: #{setr_naive_decoder.3} parent=5 // pred_fallthru
      _
    %p187 = scmp.le.s32.totalorder 1, %s11
    %p188 = scmp.lt.s32.totalorder %s11, 3
    %p189 = pnand %p187, %p188
    %p190 = pneg %p189
    // Predicated region
    $region29: #{setr_naive_decoder.3} parent=5 // pred_check
      _
    $region30: #{setr_naive_decoder.3} parent=5 // pred_check_branch
      %192 = sbr.rel (%p189) target = $region32
    $region31: #{setr_naive_decoder.3} parent=5 // pred_region
      %s193 = ssub.s32 %s11, 1
      %s194 = smul.u32 2, %s21
      %p195 = scmp.lt.s32.totalorder %s20, 1
      %s196 = scalar_select %p195, %s20, 1
      %p197 = scmp.lt.s32.totalorder %s194, 1
      %s198 = scalar_select %p197, %s194, 1
      %s199 = smul.addr %s196, 2
      %s200 = sadd.s32 %s198, %s199
      %s201 = smul.addr %s200, 4
      %s202 = scalar_lea.vmem %s0, %s201
      %p203 = pneg %p51
      %p204 = pneg %p48
      %p205 = pneg %p72
      %p206 = pneg %p69
      %p207 = pneg %p93
      %p208 = pneg %p90
      %p209 = pneg %p121
      %p210 = pneg %p118
      %p211 = scmp.lt.s32.totalorder %s20, 1
      %s212 = scalar_select %p211, %s20, 1
      %p213 = scmp.lt.s32.totalorder %s21, 0
      %s214 = scalar_select %p213, %s21, 0
      %s215 = smul.addr %s214, 2
      %s216 = smul.addr %s212, 2
      %s217 = sadd.s32 %s215, %s216
      %s218 = scalar_lea.vmem %s3, %s217
      %p219 = pneg %p149
      %p220 = pneg %p146
      %p221 = scmp.lt.s32.totalorder %s20, 1
      %s222 = scalar_select %p221, %s20, 1
      %p223 = scmp.lt.s32.totalorder %s21, 0
      %s224 = scalar_select %p223, %s21, 0
      %s225 = smul.addr %s224, 2
      %s226 = smul.addr %s222, 2
      %s227 = sadd.s32 %s225, %s226
      %s228 = scalar_lea.vmem %s4, %s227
      %s229 = smul.u32 2, %s21
      %p230 = scmp.lt.s32.totalorder %s20, 1
      %s231 = scalar_select %p230, %s20, 1
      %p232 = scmp.lt.s32.totalorder %s229, 1
      %s233 = scalar_select %p232, %s229, 1
      %s234 = smul.addr %s231, 2
      %s235 = sadd.s32 %s233, %s234
      %s236 = smul.addr %s235, 4
      %s237 = scalar_lea.vmem %s0, %s236
      %s238 = smul.u32 2, %s21
      %p239 = scmp.lt.s32.totalorder %s20, 1
      %s240 = scalar_select %p239, %s20, 1
      %p241 = scmp.lt.s32.totalorder %s21, 0
      %s242 = scalar_select %p241, %s21, 0
      %s243 = smul.addr %s242, 2
      %s244 = smul.addr %s240, 2
      %s245 = sadd.s32 %s243, %s244
      %s246 = scalar_lea.vmem %s3, %s245
      %p247 = scmp.lt.s32.totalorder %s20, 1
      %s248 = scalar_select %p247, %s20, 1
      %p249 = scmp.lt.s32.totalorder %s21, 0
      %s250 = scalar_select %p249, %s21, 0
      %s251 = smul.addr %s250, 2
      %s252 = smul.addr %s248, 2
      %s253 = sadd.s32 %s251, %s252
      %s254 = scalar_lea.vmem %s4, %s253
      %v256 = vld [vmem:[%s237] sm:$0xf]
      %v257 = vld [vmem:[%s237 + $0x4] sm:$0xf]
      %v258 = vld [vmem:[%s1] sm:$0xff]
      %v259 = vld [vmem:[%s1 + $0x8] sm:$0xff]
      %v260 = vld [vmem:[%s1 + $0x10] sm:$0xff]
      %v261 = vld [vmem:[%s1 + $0x18] sm:$0xff]
      %v262 = vld [vmem:[%s2] sm:$0x3]
      %v264 = vperm.slane %v262, 0
      %v265 = vperm.slane %v262, 1
      %v270 = vunpack.c.l.b16 %v256
      %v271 = vunpack.c.l.b16 %v257
      %v272 = vpack.c.b16 %v271, %v270
      %v277 = vunpack.c.l.b16 %v258
      %v278 = vunpack.c.h.b16 %v258
      %v279 = vunpack.c.l.b16 %v259
      %v280 = vunpack.c.h.b16 %v259
      %v281 = vunpack.c.l.b16 %v260
      %v282 = vunpack.c.h.b16 %v260
      %v283 = vunpack.c.l.b16 %v261
      %v284 = vunpack.c.h.b16 %v261
      %v285 = vpack.c.b16 %v279, %v277
      %v286 = vpack.c.b16 %v280, %v278
      %v287 = vpack.c.b16 %v283, %v281
      %v288 = vpack.c.b16 %v284, %v282
      %vm293 = vcmask 261120
      %v295 = vsel %vm293, %v272, 0
      %297 = vmatpush.bf16.msra.mxu0 0
      %298 = vmatpush.bf16.msra.mxu0 0
      %299 = vmatpush.bf16.msra.mxu0 0
      %300 = vmatpush.bf16.msra.mxu0 0
      %301 = vmatpush.bf16.msra.mxu0 0
      %302 = vmatpush.bf16.msra.mxu0 0
      %303 = vmatpush.bf16.msra.mxu0 %v287
      %304 = vmatpush.bf16.msra.mxu0 %v285
      %305 = vmatmul.bf16.gmra.mxu0 %v295
      %v306 = vpop.f32.mrf.mxu0
      %v307 = vadd.f32 %v264, %v306
      %v308 = vpop.f32.mrf.mxu0
      %v309 = vadd.f32 %v264, %v308
      %310 = vdwg.mxu0
      %311 = vmatpush.bf16.msra.mxu0 0
      %312 = vmatpush.bf16.msra.mxu0 0
      %313 = vmatpush.bf16.msra.mxu0 0
      %314 = vmatpush.bf16.msra.mxu0 0
      %315 = vmatpush.bf16.msra.mxu0 0
      %316 = vmatpush.bf16.msra.mxu0 0
      %317 = vmatpush.bf16.msra.mxu0 %v288
      %318 = vmatpush.bf16.msra.mxu0 %v286
      %319 = vmatmul.bf16.gmra.mxu0 %v295
      %v320 = vpop.f32.mrf.mxu0
      %v321 = vadd.f32 %v265, %v320
      %v322 = vpop.f32.mrf.mxu0
      %v323 = vadd.f32 %v265, %v322
      %324 = vdwg.mxu0
      %v325 = vadd.f32 %v307, %v309
      %v326 = vrot.slane %v325, 4
      %v327 = vadd.f32 %v325, %v326
      %v328 = vrot.slane %v327, 2
      %v329 = vadd.f32 %v327, %v328
      %v330 = vrot.slane %v329, 1
      %v331 = vadd.f32 %v329, %v330
      %v332 = vadd.f32 %v321, %v323
      %v333 = vrot.slane %v332, 4
      %v334 = vadd.f32 %v332, %v333
      %v335 = vrot.slane %v334, 2
      %v336 = vadd.f32 %v334, %v335
      %v337 = vrot.slane %v336, 1
      %v338 = vadd.f32 %v336, %v337
      %v341 = vrot.slane %v338, 7
      %vm342 = vcmask 1040384
      %v343 = vsel %vm342, %v331, %v341
      %v345 = vlaneseq
      %vm346 = vcmp.ge.s32.totalorder %v345, 0
      %vm347 = vcmp.lt.s32.totalorder %v345, 256
      %vm348 = vmand %vm346, %vm347
      %349 = vst.msk [vmem:[%s246] sm:$0x3] %vm348, %v343
      %v350 = vmul.f32 %v307, %v307
      %v351 = vmul.f32 %v321, %v321
      %v352 = vmul.f32 %v309, %v309
      %v353 = vmul.f32 %v323, %v323
      %v354 = vadd.f32 %v350, %v352
      %v355 = vrot.slane %v354, 4
      %v356 = vadd.f32 %v354, %v355
      %v357 = vrot.slane %v356, 2
      %v358 = vadd.f32 %v356, %v357
      %v359 = vrot.slane %v358, 1
      %v360 = vadd.f32 %v358, %v359
      %v361 = vadd.f32 %v351, %v353
      %v362 = vrot.slane %v361, 4
      %v363 = vadd.f32 %v361, %v362
      %v364 = vrot.slane %v363, 2
      %v365 = vadd.f32 %v363, %v364
      %v366 = vrot.slane %v365, 1
      %v367 = vadd.f32 %v365, %v366
      %v370 = vrot.slane %v367, 7
      %v371 = vsel %vm342, %v360, %v370
      %373 = vst.msk [vmem:[%s254] sm:$0x3] %vm348, %v371
      %p374 = scmp.lt.s32.totalorder %s20, 1
      %s375 = scalar_select %p374, %s20, 1
      %p376 = scmp.lt.s32.totalorder %s21, 0
      %s377 = scalar_select %p376, %s21, 0
      %s378 = smul.addr %s377, 2
      %s379 = smul.addr %s375, 2
      %s380 = sadd.s32 %s378, %s379
      %s381 = scalar_lea.vmem %s3, %s380
      %p382 = scmp.lt.s32.totalorder %s20, 1
      %s383 = scalar_select %p382, %s20, 1
      %p384 = scmp.lt.s32.totalorder %s21, 0
      %s385 = scalar_select %p384, %s21, 0
      %s386 = smul.addr %s385, 2
      %s387 = smul.addr %s383, 2
      %s388 = sadd.s32 %s386, %s387
      %s389 = scalar_lea.vmem %s4, %s388
      // Predicated region
      $region33: #{setr_naive_decoder.3} parent=31 // pred_check
        %p390 = pneg %p118
      $region34: #{setr_naive_decoder.3} parent=31 // pred_check_branch
        %392 = sbr.rel (%p390) target = $region36
      $region35: #{setr_naive_decoder.3} parent=31 // pred_region
        _
      $region36: #{setr_naive_decoder.3} parent=31 // pred_fallthru
        _
      // Predicated region
      $region37: #{setr_naive_decoder.3} parent=31 // pred_check
        %p393 = pneg %p146
      $region38: #{setr_naive_decoder.3} parent=31 // pred_check_branch
        %395 = sbr.rel (%p393) target = $region40
      $region39: #{setr_naive_decoder.3} parent=31 // pred_region
        _
      $region40: #{setr_naive_decoder.3} parent=31 // pred_fallthru
        _
    $region32: #{setr_naive_decoder.3} parent=5 // pred_fallthru
      _
    %p396 = scmp.le.s32.totalorder 2, %s11
    // Predicated region
    $region41: #{setr_naive_decoder.3} parent=5 // pred_check
      %p397 = pneg %p396
    $region42: #{setr_naive_decoder.3} parent=5 // pred_check_branch
      %399 = sbr.rel (%p397) target = $region44
    $region43: #{setr_naive_decoder.3} parent=5 // pred_region
      %s400 = ssub.s32 %s11, 2
      // Predicated region
      $region45: #{setr_naive_decoder.3} parent=43 // pred_check
        %p401 = pneg %p124
      $region46: #{setr_naive_decoder.3} parent=43 // pred_check_branch
        %403 = sbr.rel (%p401) target = $region48
      $region47: #{setr_naive_decoder.3} parent=43 // pred_region
        %p404 = scmp.lt.s32.totalorder %s22, 1
        %s405 = scalar_select %p404, %s22, 1
        %p406 = scmp.lt.s32.totalorder %s23, 0
        %s407 = scalar_select %p406, %s23, 0
        %s408 = smul.addr %s407, 2
        %s409 = smul.addr %s405, 2
        %s410 = sadd.s32 %s408, %s409
        %s411 = scalar_lea.vmem %s3, %s410
      $region48: #{setr_naive_decoder.3} parent=43 // pred_fallthru
        _
      // Predicated region
      $region49: #{setr_naive_decoder.3} parent=43 // pred_check
        %p412 = pneg %p152
      $region50: #{setr_naive_decoder.3} parent=43 // pred_check_branch
        %414 = sbr.rel (%p412) target = $region52
      $region51: #{setr_naive_decoder.3} parent=43 // pred_region
        %p415 = scmp.lt.s32.totalorder %s22, 1
        %s416 = scalar_select %p415, %s22, 1
        %p417 = scmp.lt.s32.totalorder %s23, 0
        %s418 = scalar_select %p417, %s23, 0
        %s419 = smul.addr %s418, 2
        %s420 = smul.addr %s416, 2
        %s421 = sadd.s32 %s419, %s420
        %s422 = scalar_lea.vmem %s4, %s421
      $region52: #{setr_naive_decoder.3} parent=43 // pred_fallthru
        _
    $region44: #{setr_naive_decoder.3} parent=5 // pred_fallthru
      _
  $region6: #{setr_naive_decoder.3} parent=0 // loop_footer
    %s15 = sadd.s32 1, %s11
  $region7: #{setr_naive_decoder.3} parent=0 // loop_footer_branch
    %10 = sbr.rel target = $region3
  $region8: #{setr_naive_decoder.3} parent=0 // loop_exit
    _

// kernel: setr_naive_decoder.5
$region0: #{setr_naive_decoder.5}
  #allocation0 [shape = 'u32[]', space=smem, size = 0x4, offset = 0x4, fixed_abs, tag = 'smem constant byte address 0x4 - core index']
  #allocation1 [shape = 'u32[72,128]{1,0:T(1,128)}', space=vmem, size = 0x9000, scoped, tag = 'internal scratch']
  %s0 = inlined_call_operand.vmem [shape: bf16[2,5,4,4], index: 0, kind: input, shape index: {}]
  %s1 = inlined_call_operand.vmem [shape: bf16[4,16], index: 1, kind: input, shape index: {}]
  %s2 = inlined_call_operand.vmem [shape: bf16[16,4], index: 2, kind: input, shape index: {}]
  %s3 = inlined_call_operand.hbm [shape: f32[2,5,16,16], index: 3, kind: output, shape index: {}]
  %s4 = sld [smem:[#allocation0]]
  $region45: #{setr_naive_decoder.5} parent=0
    _
  %s6 = ssub.s32 1, %s4
  %s7 = scalar_select 0, %s6, %s4
  $region1: #{setr_naive_decoder.5} parent=0
    #allocation2 [shape = 'u8[16384]{0}', space=vmem, size = 0x4000, scoped, tag = 'output window, operand 0']
    #allocation3 [shape = 's32[2]{0}', space=sflag, size = 0x8, scoped, tag = 'scoped memory for setr_naive_decoder.5']
    %8 = vsyncpa [#allocation3], 0
    %s9 = scalar_lea.sflag [#allocation3], 1
    %10 = vsyncpa %s9, 0
    loop: start=0, step=1, limit=12
    $region2: #{setr_naive_decoder.5} parent=1 // loop_pre_header
      _
    $region3: #{setr_naive_decoder.5} parent=1 // loop_header
      %s12 = sphi 0, %s16
      %p13 = scmp.ge.s32.totalorder %s12, 12
      %s19 = sphi 0, %s31
      %s20 = sphi 0, %s27
      %s21 = sphi 0, %s19
      %s22 = sphi 0, %s20
      %s23 = sphi 0, %s21
      %s24 = sphi 0, %s22
      %s36 = sphi 0, %s38
      %s39 = sphi 0, %s36
      %s40 = sphi 0, %s39
      %s56 = sphi 0, %s40
      %s60 = sphi 0, %s60
      %s62 = sphi 0, %s60
      %s63 = sphi 0, %s62
      %s77 = sphi 0, %s63
      %s81 = sphi 0, %s81
      %s83 = sphi 0, %s81
      %s84 = sphi 0, %s83
      %s98 = sphi 0, %s84
      %s106 = sphi 0, %s108
      %s109 = sphi 0, %s106
      %s110 = sphi 0, %s109
      %s126 = sphi 0, %s110
    $region4: #{setr_naive_decoder.5} parent=1 // loop_header_branch
      %15 = sbr.rel (%p13) target = $region8
    $region5: #{setr_naive_decoder.5} parent=1 // loop_body
      %s17 = ssub.s32 %s12, 1
      %s18 = ssub.s32 %s12, 2
      %s25 = sadd.s32 1, %s20
      %p26 = scmp.ge.s32.totalorder %s25, 5
      %s27 = scalar_select %p26, 0, %s25
      %s28 = sadd.s32 1, %s19
      %s29 = scalar_select %p26, %s28, %s19
      %p30 = scmp.ge.s32.totalorder %s29, 2
      %s31 = scalar_select %p30, 0, %s29
      %s32 = ssub.s32 %s19, %s31
      %s33 = ssub.s32 %s20, %s27
      %s34 = sor.u32 %s32, %s33
      %p35 = scmp.eq.s32.totalorder %s34, 0
      %s37 = sadd.s32 %s36, 1
      %s38 = scalar_select %p35, %s36, %s37
      %p41 = pneg %p35
      %p42 = scmp.eq.s32.totalorder %s12, 9
      %p43 = por %p41, %p42
      %p44 = scmp.ne.s32.totalorder %s36, %s39
      %p45 = scmp.eq.s32.totalorder %s12, 0
      %p46 = por %p44, %p45
      %p47 = scmp.ne.s32.totalorder %s36, %s39
      %p48 = scmp.eq.s32.totalorder %s17, 9
      %p49 = por %p47, %p48
      %p50 = scmp.ne.s32.totalorder %s39, %s40
      %p51 = scmp.eq.s32.totalorder %s17, 0
      %p52 = por %p50, %p51
      %p53 = scmp.ne.s32.totalorder %s39, %s40
      %p54 = scmp.eq.s32.totalorder %s18, 9
      %p55 = por %p53, %p54
      %p57 = scmp.ne.s32.totalorder %s40, %s56
      %p58 = scmp.eq.s32.totalorder %s18, 0
      %p59 = por %p57, %p58
      %s61 = sadd.s32 %s60, 1
      %p64 = scmp.eq.s32.totalorder %s12, 9
      %p65 = scmp.ne.s32.totalorder %s60, %s62
      %p66 = scmp.eq.s32.totalorder %s12, 0
      %p67 = por %p65, %p66
      %p68 = scmp.ne.s32.totalorder %s60, %s62
      %p69 = scmp.eq.s32.totalorder %s17, 9
      %p70 = por %p68, %p69
      %p71 = scmp.ne.s32.totalorder %s62, %s63
      %p72 = scmp.eq.s32.totalorder %s17, 0
      %p73 = por %p71, %p72
      %p74 = scmp.ne.s32.totalorder %s62, %s63
      %p75 = scmp.eq.s32.totalorder %s18, 9
      %p76 = por %p74, %p75
      %p78 = scmp.ne.s32.totalorder %s63, %s77
      %p79 = scmp.eq.s32.totalorder %s18, 0
      %p80 = por %p78, %p79
      %s82 = sadd.s32 %s81, 1
      %p85 = scmp.eq.s32.totalorder %s12, 9
      %p86 = scmp.ne.s32.totalorder %s81, %s83
      %p87 = scmp.eq.s32.totalorder %s12, 0
      %p88 = por %p86, %p87
      %p89 = scmp.ne.s32.totalorder %s81, %s83
      %p90 = scmp.eq.s32.totalorder %s17, 9
      %p91 = por %p89, %p90
      %p92 = scmp.ne.s32.totalorder %s83, %s84
      %p93 = scmp.eq.s32.totalorder %s17, 0
      %p94 = por %p92, %p93
      %p95 = scmp.ne.s32.totalorder %s83, %s84
      %p96 = scmp.eq.s32.totalorder %s18, 9
      %p97 = por %p95, %p96
      %p99 = scmp.ne.s32.totalorder %s84, %s98
      %p100 = scmp.eq.s32.totalorder %s18, 0
      %p101 = por %p99, %p100
      %s102 = ssub.s32 %s19, %s31
      %s103 = ssub.s32 %s20, %s27
      %s104 = sor.u32 %s102, %s103
      %p105 = scmp.eq.s32.totalorder %s104, 0
      %s107 = sadd.s32 %s106, 1
      %s108 = scalar_select %p105, %s106, %s107
      %p111 = pneg %p105
      %p112 = scmp.eq.s32.totalorder %s12, 9
      %p113 = por %p111, %p112
      %p114 = scmp.ne.s32.totalorder %s106, %s109
      %p115 = scmp.eq.s32.totalorder %s12, 0
      %p116 = por %p114, %p115
      %p117 = scmp.ne.s32.totalorder %s106, %s109
      %p118 = scmp.eq.s32.totalorder %s17, 9
      %p119 = por %p117, %p118
      %p120 = scmp.ne.s32.totalorder %s109, %s110
      %p121 = scmp.eq.s32.totalorder %s17, 0
      %p122 = por %p120, %p121
      %p123 = scmp.ne.s32.totalorder %s109, %s110
      %p124 = scmp.eq.s32.totalorder %s18, 9
      %p125 = por %p123, %p124
      %p127 = scmp.ne.s32.totalorder %s110, %s126
      %p128 = scmp.eq.s32.totalorder %s18, 0
      %p129 = por %p127, %p128
      %p130 = scmp.le.s32.totalorder 1, %s12
      %p131 = scmp.lt.s32.totalorder %s12, 11
      %p132 = pnand %p130, %p131
      %p133 = pneg %p132
      // Predicated region
      $region9: #{setr_naive_decoder.5} parent=5 // pred_check
        _
      $region10: #{setr_naive_decoder.5} parent=5 // pred_check_branch
        %135 = sbr.rel (%p132) target = $region12
      $region11: #{setr_naive_decoder.5} parent=5 // pred_region
        %s136 = ssub.s32 %s12, 1
        // Predicated region
        $region13: #{setr_naive_decoder.5} parent=11 // pred_check
          %p137 = pneg %p73
        $region14: #{setr_naive_decoder.5} parent=11 // pred_check_branch
          %139 = sbr.rel (%p137) target = $region16
        $region15: #{setr_naive_decoder.5} parent=11 // pred_region
          _
        $region16: #{setr_naive_decoder.5} parent=11 // pred_fallthru
          _
        // Predicated region
        $region17: #{setr_naive_decoder.5} parent=11 // pred_check
          %p140 = pneg %p94
        $region18: #{setr_naive_decoder.5} parent=11 // pred_check_branch
          %142 = sbr.rel (%p140) target = $region20
        $region19: #{setr_naive_decoder.5} parent=11 // pred_region
          _
        $region20: #{setr_naive_decoder.5} parent=11 // pred_fallthru
          _
      $region12: #{setr_naive_decoder.5} parent=5 // pred_fallthru
        _
      %p143 = scmp.lt.s32.totalorder %s12, 10
      // Predicated region
      $region21: #{setr_naive_decoder.5} parent=5 // pred_check
        %p144 = pneg %p143
      $region22: #{setr_naive_decoder.5} parent=5 // pred_check_branch
        %146 = sbr.rel (%p144) target = $region24
      $region23: #{setr_naive_decoder.5} parent=5 // pred_region
        // Predicated region
        $region25: #{setr_naive_decoder.5} parent=23 // pred_check
          %p147 = pneg %p46
        $region26: #{setr_naive_decoder.5} parent=23 // pred_check_branch
          %149 = sbr.rel (%p147) target = $region28
        $region27: #{setr_naive_decoder.5} parent=23 // pred_region
          %p150 = scmp.lt.s32.totalorder %s19, 1
          %s151 = scalar_select %p150, %s19, 1
          %p152 = scmp.lt.s32.totalorder %s20, 4
          %s153 = scalar_select %p152, %s20, 4
          %s154 = smul.addr %s151, 5
          %s155 = sadd.s32 %s153, %s154
          %s156 = smul.addr %s155, 2
          %s157 = scalar_lea.vmem %s0, %s156
        $region28: #{setr_naive_decoder.5} parent=23 // pred_fallthru
          _
      $region24: #{setr_naive_decoder.5} parent=5 // pred_fallthru
        _
      %p158 = scmp.le.s32.totalorder 1, %s12
      %p159 = scmp.lt.s32.totalorder %s12, 11
      %p160 = pnand %p158, %p159
      %p161 = pneg %p160
      // Predicated region
      $region29: #{setr_naive_decoder.5} parent=5 // pred_check
        _
      $region30: #{setr_naive_decoder.5} parent=5 // pred_check_branch
        %163 = sbr.rel (%p160) target = $region32
      $region31: #{setr_naive_decoder.5} parent=5 // pred_region
        %s164 = ssub.s32 %s12, 1
        %p165 = scmp.lt.s32.totalorder %s21, 1
        %s166 = scalar_select %p165, %s21, 1
        %p167 = scmp.lt.s32.totalorder %s22, 4
        %s168 = scalar_select %p167, %s22, 4
        %s169 = smul.addr %s166, 5
        %s170 = sadd.s32 %s168, %s169
        %s171 = smul.addr %s170, 2
        %s172 = scalar_lea.vmem %s0, %s171
        %p173 = pneg %p52
        %p174 = pneg %p49
        %p175 = pneg %p73
        %p176 = pneg %p70
        %p177 = pneg %p94
        %p178 = pneg %p91
        %p179 = pneg %p122
        %p180 = pneg %p119
        %s181 = sand.u32 %s109, 1
        %s182 = scalar_lea.sflag [#allocation3], %s181
        %s183 = sand.u32 %s109, 1
        %s184 = smul.addr %s183, 16
        %s185 = scalar_lea.vmem [#allocation2], %s184
        %p186 = scmp.lt.s32.totalorder %s21, 1
        %s187 = scalar_select %p186, %s21, 1
        %p188 = scmp.lt.s32.totalorder %s22, 4
        %s189 = scalar_select %p188, %s22, 4
        %s190 = smul.addr %s187, 5
        %s191 = sadd.s32 %s189, %s190
        %s192 = smul.addr %s191, 2
        %s193 = scalar_lea.vmem %s0, %s192
        %v195 = vld [vmem:[%s193] sm:$0x3]
        %v196 = vld [vmem:[%s1] sm:$0x3]
        %vm197 = vcmask 31744
        %v199 = vsel %vm197, %v195, 0
        %vm201 = vcmask 1041408
        %v203 = vsel %vm201, %v196, 0
        %205 = vmatpush.bf16.msra.mxu0 0
        %206 = vmatpush.bf16.msra.mxu0 0
        %207 = vmatpush.bf16.msra.mxu0 0
        %208 = vmatpush.bf16.msra.mxu0 0
        %209 = vmatpush.bf16.msra.mxu0 0
        %210 = vmatpush.bf16.msra.mxu0 0
        %211 = vmatpush.bf16.msra.mxu0 0
        %212 = vmatpush.bf16.msra.mxu0 %v203
        %213 = vmatmul.bf16.gmra.mxu0 %v199
        %v214 = vpop.f32.mrf.mxu0
        %v215 = vadd.f32 0.0, %v214
        %v216 = vpop.f32.mrf.mxu0
        %217 = vdwg.mxu0
        %v218 = vld [vmem:[%s2] sm:$0xf]
        %v219 = vld [vmem:[%s2 + $0x4] sm:$0xf]
        %v220 = vpack.c.bf16 %v215, %v215
        %v223 = vunpack.c.l.b16 %v218
        %v224 = vunpack.c.l.b16 %v219
        %v225 = vpack.c.b16 %v224, %v223
        %v227 = vsel %vm197, %v225, 0
        %v230 = vsel %vm201, %v220, 0
        %232 = vmatpush.bf16.msra.mxu0 0
        %233 = vmatpush.bf16.msra.mxu0 0
        %234 = vmatpush.bf16.msra.mxu0 0
        %235 = vmatpush.bf16.msra.mxu0 0
        %236 = vmatpush.bf16.msra.mxu0 0
        %237 = vmatpush.bf16.msra.mxu0 0
        %238 = vmatpush.bf16.msra.mxu0 0
        %239 = vmatpush.bf16.msra.mxu0 %v230
        %240 = vmatmul.bf16.gmra.mxu0 %v227
        %v241 = vpop.f32.mrf.mxu0
        %v242 = vadd.f32 0.0, %v241
        %v243 = vpop.f32.mrf.mxu0
        %v244 = vadd.f32 0.0, %v243
        %245 = vdwg.mxu0
        %vm246 = vcmask 130048
        %247 = vst.msk [vmem:[%s185] sm:$0xff] %vm246, %v242
        %248 = vst.msk [vmem:[%s185 + $0x8] sm:$0xff] %vm246, %v244
        %s249 = sand.u32 %s109, 1
        %s250 = scalar_lea.sflag [#allocation3], %s249
        %s251 = sand.u32 %s109, 1
        %s252 = smul.addr %s251, 16
        %s253 = scalar_lea.vmem [#allocation2], %s252
        // Predicated region
        $region33: #{setr_naive_decoder.5} parent=31 // pred_check
          %p254 = pneg %p119
        $region34: #{setr_naive_decoder.5} parent=31 // pred_check_branch
          %256 = sbr.rel (%p254) target = $region36
        $region35: #{setr_naive_decoder.5} parent=31 // pred_region
          %258 = vsyncadd %s250, 0
          %s259 = smul.addr %s22, 2
          %s260 = smul.addr %s21, 10
          %s261 = sadd.s32 %s259, %s260
          %s262 = smul.addr %s261, 8
          %s263 = scalar_lea.hbm %s3, %s262
          %s264 = sshll.u32 %s253, 4
          %s265 = int_to_ptr.vmem [resolvable:$true] %s264
          %s266 = sshll.u32 %s263, 4
          %s267 = int_to_ptr.hbm [resolvable:$true] %s266
          %272 = dma.vmem_to_hbm [thread:$0]  %s265, 256, %s267, %s250, 128, 128, 8
        $region36: #{setr_naive_decoder.5} parent=31 // pred_fallthru
          _
      $region32: #{setr_naive_decoder.5} parent=5 // pred_fallthru
        _
      %p273 = scmp.le.s32.totalorder 2, %s12
      // Predicated region
      $region37: #{setr_naive_decoder.5} parent=5 // pred_check
        %p274 = pneg %p273
      $region38: #{setr_naive_decoder.5} parent=5 // pred_check_branch
        %276 = sbr.rel (%p274) target = $region40
      $region39: #{setr_naive_decoder.5} parent=5 // pred_region
        %s277 = ssub.s32 %s12, 2
        // Predicated region
        $region41: #{setr_naive_decoder.5} parent=39 // pred_check
          %p278 = pneg %p125
        $region42: #{setr_naive_decoder.5} parent=39 // pred_check_branch
          %280 = sbr.rel (%p278) target = $region44
        $region43: #{setr_naive_decoder.5} parent=39 // pred_region
          %s281 = sand.u32 %s110, 1
          %s282 = scalar_lea.sflag [#allocation3], %s281
          %s283 = sand.u32 %s110, 1
          %s284 = smul.addr %s283, 16
          %s285 = scalar_lea.vmem [#allocation2], %s284
          %287 = dma.done %s282, 256
        $region44: #{setr_naive_decoder.5} parent=39 // pred_fallthru
          _
      $region40: #{setr_naive_decoder.5} parent=5 // pred_fallthru
        _
    $region6: #{setr_naive_decoder.5} parent=1 // loop_footer
      %s16 = sadd.s32 1, %s12
    $region7: #{setr_naive_decoder.5} parent=1 // loop_footer_branch
      %11 = sbr.rel target = $region3
    $region8: #{setr_naive_decoder.5} parent=1 // loop_exit
      _
    %288 = vsyncpa [#allocation3], 1
    %s289 = scalar_lea.sflag [#allocation3], 1
    %290 = vsyncpa %s289, 1

// kernel: setr_naive_decoder.4
$region0: #{setr_naive_decoder.4}
  #allocation0 [shape = 'u32[]', space=smem, size = 0x4, offset = 0x4, fixed_abs, tag = 'smem constant byte address 0x4 - core index']
  #allocation1 [shape = 'u32[72,128]{1,0:T(1,128)}', space=vmem, size = 0x9000, scoped, tag = 'internal scratch']
  %s0 = inlined_call_operand.vmem [shape: bf16[2,16,32], index: 0, kind: input, shape index: {}]
  %s1 = inlined_call_operand.vmem [shape: bf16[32,256], index: 1, kind: input, shape index: {}]
  %s2 = inlined_call_operand.vmem [shape: f32[1,256], index: 2, kind: input, shape index: {}]
  %s3 = inlined_call_operand.vmem [shape: f32[1,256], index: 3, kind: input, shape index: {}]
  %s4 = inlined_call_operand.vmem [shape: f32[1,256], index: 4, kind: input, shape index: {}]
  %s5 = inlined_call_operand.vmem [shape: bf16[256,128], index: 5, kind: input, shape index: {}]
  %s6 = inlined_call_operand.vmem [shape: f32[1,128], index: 6, kind: input, shape index: {}]
  %s7 = inlined_call_operand.vmem [shape: bf16[2,5,16], index: 7, kind: output, shape index: {}]
  %s8 = sld [smem:[#allocation0]]
  $region61: #{setr_naive_decoder.4} parent=0
    _
  %s10 = ssub.s32 1, %s8
  %s11 = scalar_select 0, %s10, %s8
  loop: start=0, step=1, limit=4
  $region2: #{setr_naive_decoder.4} parent=0 // loop_pre_header
    _
  $region3: #{setr_naive_decoder.4} parent=0 // loop_header
    %s13 = sphi 0, %s17
    %p14 = scmp.ge.s32.totalorder %s13, 4
    %s20 = sphi 0, %s32
    %s21 = sphi 0, %s28
    %s22 = sphi 0, %s20
    %s23 = sphi 0, %s21
    %s24 = sphi 0, %s22
    %s25 = sphi 0, %s23
    %s37 = sphi 0, %s39
    %s40 = sphi 0, %s37
    %s41 = sphi 0, %s40
    %s57 = sphi 0, %s41
    %s61 = sphi 0, %s61
    %s63 = sphi 0, %s61
    %s64 = sphi 0, %s63
    %s78 = sphi 0, %s64
    %s82 = sphi 0, %s82
    %s84 = sphi 0, %s82
    %s85 = sphi 0, %s84
    %s99 = sphi 0, %s85
    %s103 = sphi 0, %s103
    %s105 = sphi 0, %s103
    %s106 = sphi 0, %s105
    %s120 = sphi 0, %s106
    %s124 = sphi 0, %s124
    %s126 = sphi 0, %s124
    %s127 = sphi 0, %s126
    %s141 = sphi 0, %s127
    %s145 = sphi 0, %s145
    %s147 = sphi 0, %s145
    %s148 = sphi 0, %s147
    %s162 = sphi 0, %s148
    %s166 = sphi 0, %s166
    %s168 = sphi 0, %s166
    %s169 = sphi 0, %s168
    %s183 = sphi 0, %s169
    %s191 = sphi 0, %s193
    %s194 = sphi 0, %s191
    %s195 = sphi 0, %s194
    %s211 = sphi 0, %s195
  $region4: #{setr_naive_decoder.4} parent=0 // loop_header_branch
    %16 = sbr.rel (%p14) target = $region8
  $region5: #{setr_naive_decoder.4} parent=0 // loop_body
    %s18 = ssub.s32 %s13, 1
    %s19 = ssub.s32 %s13, 2
    %s26 = sadd.s32 1, %s21
    %p27 = scmp.ge.s32.totalorder %s26, 1
    %s28 = scalar_select %p27, 0, %s26
    %s29 = sadd.s32 1, %s20
    %s30 = scalar_select %p27, %s29, %s20
    %p31 = scmp.ge.s32.totalorder %s30, 2
    %s32 = scalar_select %p31, 0, %s30
    %s33 = ssub.s32 %s20, %s32
    %s34 = ssub.s32 %s21, %s28
    %s35 = sor.u32 %s33, %s34
    %p36 = scmp.eq.s32.totalorder %s35, 0
    %s38 = sadd.s32 %s37, 1
    %s39 = scalar_select %p36, %s37, %s38
    %p42 = pneg %p36
    %p43 = scmp.eq.s32.totalorder %s13, 1
    %p44 = por %p42, %p43
    %p45 = scmp.ne.s32.totalorder %s37, %s40
    %p46 = scmp.eq.s32.totalorder %s13, 0
    %p47 = por %p45, %p46
    %p48 = scmp.ne.s32.totalorder %s37, %s40
    %p49 = scmp.eq.s32.totalorder %s18, 1
    %p50 = por %p48, %p49
    %p51 = scmp.ne.s32.totalorder %s40, %s41
    %p52 = scmp.eq.s32.totalorder %s18, 0
    %p53 = por %p51, %p52
    %p54 = scmp.ne.s32.totalorder %s40, %s41
    %p55 = scmp.eq.s32.totalorder %s19, 1
    %p56 = por %p54, %p55
    %p58 = scmp.ne.s32.totalorder %s41, %s57
    %p59 = scmp.eq.s32.totalorder %s19, 0
    %p60 = por %p58, %p59
    %s62 = sadd.s32 %s61, 1
    %p65 = scmp.eq.s32.totalorder %s13, 1
    %p66 = scmp.ne.s32.totalorder %s61, %s63
    %p67 = scmp.eq.s32.totalorder %s13, 0
    %p68 = por %p66, %p67
    %p69 = scmp.ne.s32.totalorder %s61, %s63
    %p70 = scmp.eq.s32.totalorder %s18, 1
    %p71 = por %p69, %p70
    %p72 = scmp.ne.s32.totalorder %s63, %s64
    %p73 = scmp.eq.s32.totalorder %s18, 0
    %p74 = por %p72, %p73
    %p75 = scmp.ne.s32.totalorder %s63, %s64
    %p76 = scmp.eq.s32.totalorder %s19, 1
    %p77 = por %p75, %p76
    %p79 = scmp.ne.s32.totalorder %s64, %s78
    %p80 = scmp.eq.s32.totalorder %s19, 0
    %p81 = por %p79, %p80
    %s83 = sadd.s32 %s82, 1
    %p86 = scmp.eq.s32.totalorder %s13, 1
    %p87 = scmp.ne.s32.totalorder %s82, %s84
    %p88 = scmp.eq.s32.totalorder %s13, 0
    %p89 = por %p87, %p88
    %p90 = scmp.ne.s32.totalorder %s82, %s84
    %p91 = scmp.eq.s32.totalorder %s18, 1
    %p92 = por %p90, %p91
    %p93 = scmp.ne.s32.totalorder %s84, %s85
    %p94 = scmp.eq.s32.totalorder %s18, 0
    %p95 = por %p93, %p94
    %p96 = scmp.ne.s32.totalorder %s84, %s85
    %p97 = scmp.eq.s32.totalorder %s19, 1
    %p98 = por %p96, %p97
    %p100 = scmp.ne.s32.totalorder %s85, %s99
    %p101 = scmp.eq.s32.totalorder %s19, 0
    %p102 = por %p100, %p101
    %s104 = sadd.s32 %s103, 1
    %p107 = scmp.eq.s32.totalorder %s13, 1
    %p108 = scmp.ne.s32.totalorder %s103, %s105
    %p109 = scmp.eq.s32.totalorder %s13, 0
    %p110 = por %p108, %p109
    %p111 = scmp.ne.s32.totalorder %s103, %s105
    %p112 = scmp.eq.s32.totalorder %s18, 1
    %p113 = por %p111, %p112
    %p114 = scmp.ne.s32.totalorder %s105, %s106
    %p115 = scmp.eq.s32.totalorder %s18, 0
    %p116 = por %p114, %p115
    %p117 = scmp.ne.s32.totalorder %s105, %s106
    %p118 = scmp.eq.s32.totalorder %s19, 1
    %p119 = por %p117, %p118
    %p121 = scmp.ne.s32.totalorder %s106, %s120
    %p122 = scmp.eq.s32.totalorder %s19, 0
    %p123 = por %p121, %p122
    %s125 = sadd.s32 %s124, 1
    %p128 = scmp.eq.s32.totalorder %s13, 1
    %p129 = scmp.ne.s32.totalorder %s124, %s126
    %p130 = scmp.eq.s32.totalorder %s13, 0
    %p131 = por %p129, %p130
    %p132 = scmp.ne.s32.totalorder %s124, %s126
    %p133 = scmp.eq.s32.totalorder %s18, 1
    %p134 = por %p132, %p133
    %p135 = scmp.ne.s32.totalorder %s126, %s127
    %p136 = scmp.eq.s32.totalorder %s18, 0
    %p137 = por %p135, %p136
    %p138 = scmp.ne.s32.totalorder %s126, %s127
    %p139 = scmp.eq.s32.totalorder %s19, 1
    %p140 = por %p138, %p139
    %p142 = scmp.ne.s32.totalorder %s127, %s141
    %p143 = scmp.eq.s32.totalorder %s19, 0
    %p144 = por %p142, %p143
    %s146 = sadd.s32 %s145, 1
    %p149 = scmp.eq.s32.totalorder %s13, 1
    %p150 = scmp.ne.s32.totalorder %s145, %s147
    %p151 = scmp.eq.s32.totalorder %s13, 0
    %p152 = por %p150, %p151
    %p153 = scmp.ne.s32.totalorder %s145, %s147
    %p154 = scmp.eq.s32.totalorder %s18, 1
    %p155 = por %p153, %p154
    %p156 = scmp.ne.s32.totalorder %s147, %s148
    %p157 = scmp.eq.s32.totalorder %s18, 0
    %p158 = por %p156, %p157
    %p159 = scmp.ne.s32.totalorder %s147, %s148
    %p160 = scmp.eq.s32.totalorder %s19, 1
    %p161 = por %p159, %p160
    %p163 = scmp.ne.s32.totalorder %s148, %s162
    %p164 = scmp.eq.s32.totalorder %s19, 0
    %p165 = por %p163, %p164
    %s167 = sadd.s32 %s166, 1
    %p170 = scmp.eq.s32.totalorder %s13, 1
    %p171 = scmp.ne.s32.totalorder %s166, %s168
    %p172 = scmp.eq.s32.totalorder %s13, 0
    %p173 = por %p171, %p172
    %p174 = scmp.ne.s32.totalorder %s166, %s168
    %p175 = scmp.eq.s32.totalorder %s18, 1
    %p176 = por %p174, %p175
    %p177 = scmp.ne.s32.totalorder %s168, %s169
    %p178 = scmp.eq.s32.totalorder %s18, 0
    %p179 = por %p177, %p178
    %p180 = scmp.ne.s32.totalorder %s168, %s169
    %p181 = scmp.eq.s32.totalorder %s19, 1
    %p182 = por %p180, %p181
    %p184 = scmp.ne.s32.totalorder %s169, %s183
    %p185 = scmp.eq.s32.totalorder %s19, 0
    %p186 = por %p184, %p185
    %s187 = ssub.s32 %s20, %s32
    %s188 = ssub.s32 %s21, %s28
    %s189 = sor.u32 %s187, %s188
    %p190 = scmp.eq.s32.totalorder %s189, 0
    %s192 = sadd.s32 %s191, 1
    %s193 = scalar_select %p190, %s191, %s192
    %p196 = pneg %p190
    %p197 = scmp.eq.s32.totalorder %s13, 1
    %p198 = por %p196, %p197
    %p199 = scmp.ne.s32.totalorder %s191, %s194
    %p200 = scmp.eq.s32.totalorder %s13, 0
    %p201 = por %p199, %p200
    %p202 = scmp.ne.s32.totalorder %s191, %s194
    %p203 = scmp.eq.s32.totalorder %s18, 1
    %p204 = por %p202, %p203
    %p205 = scmp.ne.s32.totalorder %s194, %s195
    %p206 = scmp.eq.s32.totalorder %s18, 0
    %p207 = por %p205, %p206
    %p208 = scmp.ne.s32.totalorder %s194, %s195
    %p209 = scmp.eq.s32.totalorder %s19, 1
    %p210 = por %p208, %p209
    %p212 = scmp.ne.s32.totalorder %s195, %s211
    %p213 = scmp.eq.s32.totalorder %s19, 0
    %p214 = por %p212, %p213
    %p215 = scmp.le.s32.totalorder 1, %s13
    %p216 = scmp.lt.s32.totalorder %s13, 3
    %p217 = pnand %p215, %p216
    %p218 = pneg %p217
    // Predicated region
    $region9: #{setr_naive_decoder.4} parent=5 // pred_check
      _
    $region10: #{setr_naive_decoder.4} parent=5 // pred_check_branch
      %220 = sbr.rel (%p217) target = $region12
    $region11: #{setr_naive_decoder.4} parent=5 // pred_region
      %s221 = ssub.s32 %s13, 1
      // Predicated region
      $region13: #{setr_naive_decoder.4} parent=11 // pred_check
        %p222 = pneg %p74
      $region14: #{setr_naive_decoder.4} parent=11 // pred_check_branch
        %224 = sbr.rel (%p222) target = $region16
      $region15: #{setr_naive_decoder.4} parent=11 // pred_region
        _
      $region16: #{setr_naive_decoder.4} parent=11 // pred_fallthru
        _
      // Predicated region
      $region17: #{setr_naive_decoder.4} parent=11 // pred_check
        %p225 = pneg %p95
      $region18: #{setr_naive_decoder.4} parent=11 // pred_check_branch
        %227 = sbr.rel (%p225) target = $region20
      $region19: #{setr_naive_decoder.4} parent=11 // pred_region
        _
      $region20: #{setr_naive_decoder.4} parent=11 // pred_fallthru
        _
      // Predicated region
      $region21: #{setr_naive_decoder.4} parent=11 // pred_check
        %p228 = pneg %p116
      $region22: #{setr_naive_decoder.4} parent=11 // pred_check_branch
        %230 = sbr.rel (%p228) target = $region24
      $region23: #{setr_naive_decoder.4} parent=11 // pred_region
        _
      $region24: #{setr_naive_decoder.4} parent=11 // pred_fallthru
        _
      // Predicated region
      $region25: #{setr_naive_decoder.4} parent=11 // pred_check
        %p231 = pneg %p137
      $region26: #{setr_naive_decoder.4} parent=11 // pred_check_branch
        %233 = sbr.rel (%p231) target = $region28
      $region27: #{setr_naive_decoder.4} parent=11 // pred_region
        _
      $region28: #{setr_naive_decoder.4} parent=11 // pred_fallthru
        _
      // Predicated region
      $region29: #{setr_naive_decoder.4} parent=11 // pred_check
        %p234 = pneg %p158
      $region30: #{setr_naive_decoder.4} parent=11 // pred_check_branch
        %236 = sbr.rel (%p234) target = $region32
      $region31: #{setr_naive_decoder.4} parent=11 // pred_region
        _
      $region32: #{setr_naive_decoder.4} parent=11 // pred_fallthru
        _
      // Predicated region
      $region33: #{setr_naive_decoder.4} parent=11 // pred_check
        %p237 = pneg %p179
      $region34: #{setr_naive_decoder.4} parent=11 // pred_check_branch
        %239 = sbr.rel (%p237) target = $region36
      $region35: #{setr_naive_decoder.4} parent=11 // pred_region
        _
      $region36: #{setr_naive_decoder.4} parent=11 // pred_fallthru
        _
    $region12: #{setr_naive_decoder.4} parent=5 // pred_fallthru
      _
    %p240 = scmp.lt.s32.totalorder %s13, 2
    // Predicated region
    $region37: #{setr_naive_decoder.4} parent=5 // pred_check
      %p241 = pneg %p240
    $region38: #{setr_naive_decoder.4} parent=5 // pred_check_branch
      %243 = sbr.rel (%p241) target = $region40
    $region39: #{setr_naive_decoder.4} parent=5 // pred_region
      // Predicated region
      $region41: #{setr_naive_decoder.4} parent=39 // pred_check
        %p244 = pneg %p47
      $region42: #{setr_naive_decoder.4} parent=39 // pred_check_branch
        %246 = sbr.rel (%p244) target = $region44
      $region43: #{setr_naive_decoder.4} parent=39 // pred_region
        %s247 = smul.u32 2, %s21
        %p248 = scmp.lt.s32.totalorder %s20, 1
        %s249 = scalar_select %p248, %s20, 1
        %p250 = scmp.lt.s32.totalorder %s247, 1
        %s251 = scalar_select %p250, %s247, 1
        %s252 = smul.addr %s249, 2
        %s253 = sadd.s32 %s251, %s252
        %s254 = smul.addr %s253, 4
        %s255 = scalar_lea.vmem %s0, %s254
        %s256 = smul.u32 2, %s21
      $region44: #{setr_naive_decoder.4} parent=39 // pred_fallthru
        _
    $region40: #{setr_naive_decoder.4} parent=5 // pred_fallthru
      _
    %p257 = scmp.le.s32.totalorder 1, %s13
    %p258 = scmp.lt.s32.totalorder %s13, 3
    %p259 = pnand %p257, %p258
    %p260 = pneg %p259
    // Predicated region
    $region45: #{setr_naive_decoder.4} parent=5 // pred_check
      _
    $region46: #{setr_naive_decoder.4} parent=5 // pred_check_branch
      %262 = sbr.rel (%p259) target = $region48
    $region47: #{setr_naive_decoder.4} parent=5 // pred_region
      %s263 = ssub.s32 %s13, 1
      %s264 = smul.u32 2, %s23
      %p265 = scmp.lt.s32.totalorder %s22, 1
      %s266 = scalar_select %p265, %s22, 1
      %p267 = scmp.lt.s32.totalorder %s264, 1
      %s268 = scalar_select %p267, %s264, 1
      %s269 = smul.addr %s266, 2
      %s270 = sadd.s32 %s268, %s269
      %s271 = smul.addr %s270, 4
      %s272 = scalar_lea.vmem %s0, %s271
      %p273 = pneg %p53
      %p274 = pneg %p50
      %p275 = pneg %p74
      %p276 = pneg %p71
      %p277 = pneg %p95
      %p278 = pneg %p92
      %p279 = pneg %p116
      %p280 = pneg %p113
      %p281 = pneg %p137
      %p282 = pneg %p134
      %p283 = pneg %p158
      %p284 = pneg %p155
      %p285 = pneg %p179
      %p286 = pneg %p176
      %p287 = pneg %p207
      %p288 = pneg %p204
      %p289 = scmp.lt.s32.totalorder %s22, 1
      %s290 = scalar_select %p289, %s22, 1
      %p291 = scmp.lt.s32.totalorder %s23, 0
      %s292 = scalar_select %p291, %s23, 0
      %s293 = sadd.s32 %s292, %s290
      %s294 = smul.addr %s293, 4
      %s295 = scalar_lea.vmem %s7, %s294
      %s296 = smul.u32 2, %s23
      %p297 = scmp.lt.s32.totalorder %s22, 1
      %s298 = scalar_select %p297, %s22, 1
      %p299 = scmp.lt.s32.totalorder %s296, 1
      %s300 = scalar_select %p299, %s296, 1
      %s301 = smul.addr %s298, 2
      %s302 = sadd.s32 %s300, %s301
      %s303 = smul.addr %s302, 4
      %s304 = scalar_lea.vmem %s0, %s303
      %s305 = smul.u32 2, %s23
      %p306 = scmp.lt.s32.totalorder %s22, 1
      %s307 = scalar_select %p306, %s22, 1
      %p308 = scmp.lt.s32.totalorder %s23, 0
      %s309 = scalar_select %p308, %s23, 0
      %s310 = sadd.s32 %s309, %s307
      %s311 = smul.addr %s310, 4
      %s312 = scalar_lea.vmem %s7, %s311
      %v314 = vld [vmem:[%s304] sm:$0xf]
      %v315 = vld [vmem:[%s304 + $0x4] sm:$0xf]
      %v316 = vld [vmem:[%s1] sm:$0xff]
      %v317 = vld [vmem:[%s1 + $0x8] sm:$0xff]
      %v318 = vld [vmem:[%s1 + $0x10] sm:$0xff]
      %v319 = vld [vmem:[%s1 + $0x18] sm:$0xff]
      %v320 = vld [vmem:[%s2] sm:$0x3]
      %v322 = vperm.slane %v320, 0
      %v323 = vperm.slane %v320, 1
      %v328 = vunpack.c.l.b16 %v314
      %v329 = vunpack.c.l.b16 %v315
      %v330 = vpack.c.b16 %v329, %v328
      %v335 = vunpack.c.l.b16 %v316
      %v336 = vunpack.c.h.b16 %v316
      %v337 = vunpack.c.l.b16 %v317
      %v338 = vunpack.c.h.b16 %v317
      %v339 = vunpack.c.l.b16 %v318
      %v340 = vunpack.c.h.b16 %v318
      %v341 = vunpack.c.l.b16 %v319
      %v342 = vunpack.c.h.b16 %v319
      %v343 = vpack.c.b16 %v337, %v335
      %v344 = vpack.c.b16 %v338, %v336
      %v345 = vpack.c.b16 %v341, %v339
      %v346 = vpack.c.b16 %v342, %v340
      %vm351 = vcmask 261120
      %v353 = vsel %vm351, %v330, 0
      %355 = vmatpush.bf16.msra.mxu0 0
      %356 = vmatpush.bf16.msra.mxu0 0
      %357 = vmatpush.bf16.msra.mxu0 0
      %358 = vmatpush.bf16.msra.mxu0 0
      %359 = vmatpush.bf16.msra.mxu0 0
      %360 = vmatpush.bf16.msra.mxu0 0
      %361 = vmatpush.bf16.msra.mxu0 %v345
      %362 = vmatpush.bf16.msra.mxu0 %v343
      %363 = vmatmul.bf16.gmra.mxu0 %v353
      %v364 = vpop.f32.mrf.mxu0
      %v365 = vadd.f32 %v322, %v364
      %v366 = vpop.f32.mrf.mxu0
      %v367 = vadd.f32 %v322, %v366
      %368 = vdwg.mxu0
      %369 = vmatpush.bf16.msra.mxu0 0
      %370 = vmatpush.bf16.msra.mxu0 0
      %371 = vmatpush.bf16.msra.mxu0 0
      %372 = vmatpush.bf16.msra.mxu0 0
      %373 = vmatpush.bf16.msra.mxu0 0
      %374 = vmatpush.bf16.msra.mxu0 0
      %375 = vmatpush.bf16.msra.mxu0 %v346
      %376 = vmatpush.bf16.msra.mxu0 %v344
      %377 = vmatmul.bf16.gmra.mxu0 %v353
      %v378 = vpop.f32.mrf.mxu0
      %v379 = vadd.f32 %v323, %v378
      %v380 = vpop.f32.mrf.mxu0
      %v381 = vadd.f32 %v323, %v380
      %382 = vdwg.mxu0
      %v383 = vld [vmem:[%s3] sm:$0x3]
      %v385 = vperm.slane %v383, 0
      %v386 = vperm.slane %v383, 1
      %v389 = vmul.f32 %v365, %v385
      %v390 = vmul.f32 %v379, %v386
      %v391 = vmul.f32 %v367, %v385
      %v392 = vmul.f32 %v381, %v386
      %v393 = vld [vmem:[%s4] sm:$0x3]
      %v395 = vperm.slane %v393, 0
      %v396 = vperm.slane %v393, 1
      %v399 = vadd.f32 %v389, %v395
      %v400 = vadd.f32 %v390, %v396
      %v401 = vadd.f32 %v391, %v395
      %v402 = vadd.f32 %v392, %v396
      %v403 = vmax.f32 %v399, 0.0
      %v404 = vmax.f32 %v400, 0.0
      %v405 = vmax.f32 %v401, 0.0
      %v406 = vmax.f32 %v402, 0.0
      %v407 = vpack.c.bf16 %v405, %v403
      %v408 = vpack.c.bf16 %v406, %v404
      %v409 = vld [vmem:[%s5] sm:$0xf]
      %v410 = vld [vmem:[%s5 + $0x4] sm:$0xf]
      %v411 = vld [vmem:[%s5 + $0x8] sm:$0xf]
      %v412 = vld [vmem:[%s5 + $0xc] sm:$0xf]
      %v413 = vld [vmem:[%s5 + $0x10] sm:$0xf]
      %v414 = vld [vmem:[%s5 + $0x14] sm:$0xf]
      %v415 = vld [vmem:[%s5 + $0x18] sm:$0xf]
      %v416 = vld [vmem:[%s5 + $0x1c] sm:$0xf]
      %v417 = vld [vmem:[%s5 + $0x20] sm:$0xf]
      %v418 = vld [vmem:[%s5 + $0x24] sm:$0xf]
      %v419 = vld [vmem:[%s5 + $0x28] sm:$0xf]
      %v420 = vld [vmem:[%s5 + $0x2c] sm:$0xf]
      %v421 = vld [vmem:[%s5 + $0x30] sm:$0xf]
      %v422 = vld [vmem:[%s5 + $0x34] sm:$0xf]
      %v423 = vld [vmem:[%s5 + $0x38] sm:$0xf]
      %v424 = vld [vmem:[%s5 + $0x3c] sm:$0xf]
      %v425 = vld [vmem:[%s5 + $0x40] sm:$0xf]
      %v426 = vld [vmem:[%s5 + $0x44] sm:$0xf]
      %v427 = vld [vmem:[%s5 + $0x48] sm:$0xf]
      %v428 = vld [vmem:[%s5 + $0x4c] sm:$0xf]
      %v429 = vld [vmem:[%s5 + $0x50] sm:$0xf]
      %v430 = vld [vmem:[%s5 + $0x54] sm:$0xf]
      %v431 = vld [vmem:[%s5 + $0x58] sm:$0xf]
      %v432 = vld [vmem:[%s5 + $0x5c] sm:$0xf]
      %v433 = vld [vmem:[%s5 + $0x60] sm:$0xf]
      %v434 = vld [vmem:[%s5 + $0x64] sm:$0xf]
      %v435 = vld [vmem:[%s5 + $0x68] sm:$0xf]
      %v436 = vld [vmem:[%s5 + $0x6c] sm:$0xf]
      %v437 = vld [vmem:[%s5 + $0x70] sm:$0xf]
      %v438 = vld [vmem:[%s5 + $0x74] sm:$0xf]
      %v439 = vld [vmem:[%s5 + $0x78] sm:$0xf]
      %v440 = vld [vmem:[%s5 + $0x7c] sm:$0xf]
      %v441 = vld [vmem:[%s6] sm:$0x1]
      %v443 = vperm.slane %v441, 0
      %v477 = vunpack.c.l.b16 %v409
      %v478 = vunpack.c.l.b16 %v410
      %v479 = vunpack.c.l.b16 %v411
      %v480 = vunpack.c.l.b16 %v412
      %v481 = vunpack.c.l.b16 %v413
      %v482 = vunpack.c.l.b16 %v414
      %v483 = vunpack.c.l.b16 %v415
      %v484 = vunpack.c.l.b16 %v416
      %v485 = vunpack.c.l.b16 %v417
      %v486 = vunpack.c.l.b16 %v418
      %v487 = vunpack.c.l.b16 %v419
      %v488 = vunpack.c.l.b16 %v420
      %v489 = vunpack.c.l.b16 %v421
      %v490 = vunpack.c.l.b16 %v422
      %v491 = vunpack.c.l.b16 %v423
      %v492 = vunpack.c.l.b16 %v424
      %v493 = vunpack.c.l.b16 %v425
      %v494 = vunpack.c.l.b16 %v426
      %v495 = vunpack.c.l.b16 %v427
      %v496 = vunpack.c.l.b16 %v428
      %v497 = vunpack.c.l.b16 %v429
      %v498 = vunpack.c.l.b16 %v430
      %v499 = vunpack.c.l.b16 %v431
      %v500 = vunpack.c.l.b16 %v432
      %v501 = vunpack.c.l.b16 %v433
      %v502 = vunpack.c.l.b16 %v434
      %v503 = vunpack.c.l.b16 %v435
      %v504 = vunpack.c.l.b16 %v436
      %v505 = vunpack.c.l.b16 %v437
      %v506 = vunpack.c.l.b16 %v438
      %v507 = vunpack.c.l.b16 %v439
      %v508 = vunpack.c.l.b16 %v440
      %v509 = vpack.c.b16 %v478, %v477
      %v510 = vpack.c.b16 %v480, %v479
      %v511 = vpack.c.b16 %v482, %v481
      %v512 = vpack.c.b16 %v484, %v483
      %v513 = vpack.c.b16 %v486, %v485
      %v514 = vpack.c.b16 %v488, %v487
      %v515 = vpack.c.b16 %v490, %v489
      %v516 = vpack.c.b16 %v492, %v491
      %v517 = vpack.c.b16 %v494, %v493
      %v518 = vpack.c.b16 %v496, %v495
      %v519 = vpack.c.b16 %v498, %v497
      %v520 = vpack.c.b16 %v500, %v499
      %v521 = vpack.c.b16 %v502, %v501
      %v522 = vpack.c.b16 %v504, %v503
      %v523 = vpack.c.b16 %v506, %v505
      %v524 = vpack.c.b16 %v508, %v507
      %541 = vmatpush.bf16.msra.mxu0 %v516
      %542 = vmatpush.bf16.msra.mxu0 %v515
      %543 = vmatpush.bf16.msra.mxu0 %v514
      %544 = vmatpush.bf16.msra.mxu0 %v513
      %545 = vmatpush.bf16.msra.mxu0 %v512
      %546 = vmatpush.bf16.msra.mxu0 %v511
      %547 = vmatpush.bf16.msra.mxu0 %v510
      %548 = vmatpush.bf16.msra.mxu0 %v509
      %549 = vmatmul.bf16.gmra.mxu0 %v407
      %v550 = vpop.f32.mrf.mxu0
      %v551 = vadd.f32 %v443, %v550
      %v552 = vpop.f32.mrf.mxu0
      %v553 = vadd.f32 %v443, %v552
      %554 = vdwg.mxu0
      %555 = vmatpush.bf16.msra.mxu0 %v524
      %556 = vmatpush.bf16.msra.mxu0 %v523
      %557 = vmatpush.bf16.msra.mxu0 %v522
      %558 = vmatpush.bf16.msra.mxu0 %v521
      %559 = vmatpush.bf16.msra.mxu0 %v520
      %560 = vmatpush.bf16.msra.mxu0 %v519
      %561 = vmatpush.bf16.msra.mxu0 %v518
      %562 = vmatpush.bf16.msra.mxu0 %v517
      %563 = vmatmul.bf16.gmra.mxu0 %v408
      %v564 = vpop.f32.mrf.mxu0
      %v565 = vadd.f32 %v551, %v564
      %v566 = vpop.f32.mrf.mxu0
      %v567 = vadd.f32 %v553, %v566
      %568 = vdwg.mxu0
      %569 = vxpose.xlu0.b32.start [1/16] %v565, 128
      %570 = vxpose.xlu0.b32.cont [2/16] %v567, 128
      %571 = vxpose.xlu0.b32.cont [3/16] 0.0, 128
      %572 = vxpose.xlu0.b32.cont [4/16] 0.0, 128
      %573 = vxpose.xlu0.b32.cont [5/16] 0.0, 128
      %574 = vxpose.xlu0.b32.cont [6/16] 0.0, 128
      %575 = vxpose.xlu0.b32.cont [7/16] 0.0, 128
      %576 = vxpose.xlu0.b32.cont [8/16] 0.0, 128
      %577 = vxpose.xlu0.b32.cont [9/16] 0.0, 128
      %578 = vxpose.xlu0.b32.cont [10/16] 0.0, 128
      %579 = vxpose.xlu0.b32.cont [11/16] 0.0, 128
      %580 = vxpose.xlu0.b32.cont [12/16] 0.0, 128
      %581 = vxpose.xlu0.b32.cont [13/16] 0.0, 128
      %582 = vxpose.xlu0.b32.cont [14/16] 0.0, 128
      %583 = vxpose.xlu0.b32.cont [15/16] 0.0, 128
      %584 = vxpose.xlu0.b32.end [16/16] 0.0, 128
      %v585 = vpop.trf.xlu0
      %v586 = vpop.trf.xlu0
      %v587 = vpop.trf.xlu0
      %v588 = vpop.trf.xlu0
      %v589 = vpop.trf.xlu0
      %v590 = vpop.trf.xlu0
      %v591 = vpop.trf.xlu0
      %v592 = vpop.trf.xlu0
      %v593 = vpop.trf.xlu0
      %v594 = vpop.trf.xlu0
      %v595 = vpop.trf.xlu0
      %v596 = vpop.trf.xlu0
      %v597 = vpop.trf.xlu0
      %v598 = vpop.trf.xlu0
      %v599 = vpop.trf.xlu0
      %v600 = vpop.trf.xlu0
      %v601 = vpack.c.bf16 %v585, %v585
      %vm602 = vcmask 124928
      %vm603 = vsmask.f32 2304
      %vm604 = vmand %vm602, %vm603
      %v605 = vld [vmem:[%s312] sm:$0x7]
      %v606 = vsel %vm604, %v601, %v605
      %607 = vst [vmem:[%s312] sm:$0x7] %v606
      %p608 = scmp.lt.s32.totalorder %s22, 1
      %s609 = scalar_select %p608, %s22, 1
      %p610 = scmp.lt.s32.totalorder %s23, 0
      %s611 = scalar_select %p610, %s23, 0
      %s612 = sadd.s32 %s611, %s609
      %s613 = smul.addr %s612, 4
      %s614 = scalar_lea.vmem %s7, %s613
      // Predicated region
      $region49: #{setr_naive_decoder.4} parent=47 // pred_check
        %p615 = pneg %p204
      $region50: #{setr_naive_decoder.4} parent=47 // pred_check_branch
        %617 = sbr.rel (%p615) target = $region52
      $region51: #{setr_naive_decoder.4} parent=47 // pred_region
        _
      $region52: #{setr_naive_decoder.4} parent=47 // pred_fallthru
        _
    $region48: #{setr_naive_decoder.4} parent=5 // pred_fallthru
      _
    %p618 = scmp.le.s32.totalorder 2, %s13
    // Predicated region
    $region53: #{setr_naive_decoder.4} parent=5 // pred_check
      %p619 = pneg %p618
    $region54: #{setr_naive_decoder.4} parent=5 // pred_check_branch
      %621 = sbr.rel (%p619) target = $region56
    $region55: #{setr_naive_decoder.4} parent=5 // pred_region
      %s622 = ssub.s32 %s13, 2
      // Predicated region
      $region57: #{setr_naive_decoder.4} parent=55 // pred_check
        %p623 = pneg %p210
      $region58: #{setr_naive_decoder.4} parent=55 // pred_check_branch
        %625 = sbr.rel (%p623) target = $region60
      $region59: #{setr_naive_decoder.4} parent=55 // pred_region
        %p626 = scmp.lt.s32.totalorder %s24, 1
        %s627 = scalar_select %p626, %s24, 1
        %p628 = scmp.lt.s32.totalorder %s25, 0
        %s629 = scalar_select %p628, %s25, 0
        %s630 = sadd.s32 %s629, %s627
        %s631 = smul.addr %s630, 4
        %s632 = scalar_lea.vmem %s7, %s631
      $region60: #{setr_naive_decoder.4} parent=55 // pred_fallthru
        _
    $region56: #{setr_naive_decoder.4} parent=5 // pred_fallthru
      _
  $region6: #{setr_naive_decoder.4} parent=0 // loop_footer
    %s17 = sadd.s32 1, %s13
  $region7: #{setr_naive_decoder.4} parent=0 // loop_footer_branch
    %12 = sbr.rel target = $region3
  $region8: #{setr_naive_decoder.4} parent=0 // loop_exit
    _

</llo_original>
